<compile_context>
chip_gen: v7x
topology: tpu7x:2x2x1
jax: 0.10.0
libtpu: 0.0.40
codegen_flags: <defaults>
</compile_context>

<pallas_src>
import math

import jax
import jax.numpy as jnp
from jax import lax
from jax.experimental import pallas as pl
from jax.experimental.pallas import tpu as pltpu

LANE = 128
SUBLANE = 8


def _round_up(x, m):
    return ((x + m - 1) // m) * m


def _pick_time_block(T, cap=16):
    tb = 1
    for c in range(1, min(T, cap) + 1):
        if T % c == 0:
            tb = c
    return tb


# ----------------------------------------------------------------------------
# Kernel
# ----------------------------------------------------------------------------
def gru_encoder_kernel(emb_ref, wih_ref, whh_ref, bih_ref, bhh_ref, fcw_ref,
                       out_ref, hpart_ref, h_scr, gi_scr):
    d = pl.program_id(0)            # 0 = forward scan, 1 = backward scan
    i = pl.program_id(1)            # time-block index within this direction
    nb = pl.num_programs(1)
    TT, Bp, Hp = out_ref.shape      # output block: [TT, B_pad, H_pad]

    # Fresh hidden state at the start of each direction's scan.
    @pl.when(i == 0)
    def _():
        h_scr[...] = jnp.zeros_like(h_scr)

    # Hoisted input projection for the whole time block: ONE MXU matmul over
    # TT*Bp rows (bf16 operands, f32 accumulate), input bias folded in here.
    gi_scr[...] = (
        jnp.dot(emb_ref[...], wih_ref[0], preferred_element_type=jnp.float32)
        + bih_ref[0]
    )

    whh = whh_ref[0]                                      # [Hp, 3Hp] bf16 (loop-invariant)
    bhh = jnp.broadcast_to(bhh_ref[0], (Bp, 3 * Hp))      # broadcast hoisted out of loop

    def step(tt, h):
        # forward scan walks the block 0..TT-1; backward scan walks TT-1..0
        local = tt + d * (TT - 1 - 2 * tt)
        row = pl.multiple_of(local * Bp, Bp)
        gi = gi_scr[pl.ds(row, Bp), :]                    # [Bp, 3Hp] f32 (precomputed)
        gh = jnp.dot(h.astype(jnp.bfloat16), whh,
                     preferred_element_type=jnp.float32) + bhh
        # PyTorch GRU gate order (r, z, n); gate slices are lane-aligned (Hp % 128 == 0)
        r = jax.nn.sigmoid(gi[:, 0:Hp] + gh[:, 0:Hp])
        z = jax.nn.sigmoid(gi[:, Hp:2 * Hp] + gh[:, Hp:2 * Hp])
        n = jnp.tanh(gi[:, 2 * Hp:3 * Hp] + r * gh[:, 2 * Hp:3 * Hp])
        h_new = (1.0 - z) * n + z * h
        out_ref[local] = h_new        # lane half (fwd/bwd) selected by the out BlockSpec
        return h_new

    h_final = lax.fori_loop(0, TT, step, h_scr[...], unroll=True)
    h_scr[...] = h_final              # carry recurrent state across time blocks

    # Per-direction contribution to hidden = tanh(fc(cat(h_fwd, h_bwd))):
    # h_final @ fc_w_dir.  Bias + tanh (on a tiny [B, D]) happen in the wrapper.
    @pl.when(i == nb - 1)
    def _():
        hpart_ref[0] = jnp.dot(h_final.astype(jnp.bfloat16), fcw_ref[0],
                               preferred_element_type=jnp.float32)


# ----------------------------------------------------------------------------
# Wrapper
# ----------------------------------------------------------------------------
def encoder_forward(src, kp, *, time_block=None):
    """src: [T, B] int32 token ids. Returns (outputs [T,B,2H], hidden [B,D])."""
    # Embedding lookup (+ dropout as identity) -- plain-JAX glue.
    emb = jnp.take(kp["emb"], src, axis=0)                # [T, B, E] f32
    T, B, E = emb.shape
    H, Hp, D = kp["H"], kp["Hp"], kp["D"]
    Bp = _round_up(max(B, 1), SUBLANE)
    TT = time_block if time_block is not None else _pick_time_block(T)
    if T % TT != 0:
        raise ValueError(f"time_block {TT} must divide T {T}")
    nb = T // TT

    # Pad batch to the sublane quantum, cast to bf16, flatten (t, b) for the
    # hoisted per-block input projection.
    emb_p = jnp.pad(emb, ((0, 0), (0, Bp - B), (0, 0))).astype(jnp.bfloat16)
    emb2d = emb_p.reshape(T * Bp, E)

    def dir_time_map(d, i):          # forward: block i ; backward: block nb-1-i
        return (i + d * (nb - 1 - 2 * i), 0)

    def dir_map(d, i):               # per-direction weights/biases
        return (d, 0, 0)

    def out_map(d, i):               # time block + lane half selected by direction
        return (i + d * (nb - 1 - 2 * i), 0, d)

    grid_spec = pltpu.PrefetchScalarGridSpec(
        num_scalar_prefetch=0,
        grid=(2, nb),
        in_specs=[
            pl.BlockSpec((TT * Bp, E), dir_time_map),         # embedded inputs
            pl.BlockSpec((1, E, 3 * Hp), dir_map),            # W_ih (per dir)
            pl.BlockSpec((1, Hp, 3 * Hp), dir_map),           # W_hh (per dir)
            pl.BlockSpec((1, 1, 3 * Hp), dir_map),            # b_ih
            pl.BlockSpec((1, 1, 3 * Hp), dir_map),            # b_hh
            pl.BlockSpec((1, Hp, D), dir_map),                # fc weight half
        ],
        out_specs=(
            pl.BlockSpec((TT, Bp, Hp), out_map),              # lane-dense fused output
            pl.BlockSpec((1, Bp, D), dir_map),                # per-direction fc partials
        ),
        scratch_shapes=[
            pltpu.VMEM((Bp, Hp), jnp.float32),                # recurrent state
            pltpu.VMEM((TT * Bp, 3 * Hp), jnp.float32),       # hoisted input projections
        ],
    )

    out_pad, hpart = pl.pallas_call(
        gru_encoder_kernel,
        out_shape=(
            jax.ShapeDtypeStruct((T, Bp, 2 * Hp), jnp.float32),
            jax.ShapeDtypeStruct((2, Bp, D), jnp.float32),
        ),
        grid_spec=grid_spec,
        compiler_params=pltpu.CompilerParams(
            dimension_semantics=("parallel", "arbitrary")),
    )(emb2d, kp["wih"], kp["whh"], kp["bih"], kp["bhh"], kp["fcw"])

    if Hp == H and Bp == B:          # already lane/sublane aligned: zero-copy output
        outputs = out_pad
    else:                            # strip padding (tiny for the demo shapes)
        outputs = jnp.concatenate(
            [out_pad[:, :B, :H], out_pad[:, :B, Hp:Hp + H]], axis=-1)

    hidden = jnp.tanh(hpart[0, :B, :] + hpart[1, :B, :] + kp["fcb"][None, :])
    return outputs, hidden


# ----------------------------------------------------------------------------
# Parameters (PyTorch-equivalent init) and kernel-layout packing
# ----------------------------------------------------------------------------
def init_params(key, input_dim, emb_dim, enc_hid, dec_hid):
    keys = jax.random.split(key, 11)
    kg = 1.0 / math.sqrt(enc_hid)
    kf = 1.0 / math.sqrt(2 * enc_hid)

    def u(kk, shape, s):
        return jax.random.uniform(kk, shape, jnp.float32, minval=-s, maxval=s)

    return dict(
        emb=jax.random.normal(keys[0], (input_dim, emb_dim), jnp.float32),
        # nn.GRU params, PyTorch layout [3H, E] / [3H, H], gate order (r, z, n)
        wih_f=u(keys[1], (3 * enc_hid, emb_dim), kg),
        whh_f=u(keys[2], (3 * enc_hid, enc_hid), kg),
        bih_f=u(keys[3], (3 * enc_hid,), kg),
        bhh_f=u(keys[4], (3 * enc_hid,), kg),
        wih_b=u(keys[5], (3 * enc_hid, emb_dim), kg),
        whh_b=u(keys[6], (3 * enc_hid, enc_hid), kg),
        bih_b=u(keys[7], (3 * enc_hid,), kg),
        bhh_b=u(keys[8], (3 * enc_hid,), kg),
        # nn.Linear(2H, D)
        fc_w=u(keys[9], (dec_hid, 2 * enc_hid), kf),
        fc_b=u(keys[10], (dec_hid,), kf),
    )


def pack_params(p):
    """Pad H to a lane multiple, transpose to x@W layout, cast weights to bf16."""
    H = p["whh_f"].shape[1]
    E = p["wih_f"].shape[1]
    D = p["fc_w"].shape[0]
    Hp = _round_up(H, LANE)

    def pad_gates_w(w, in_dim, in_pad):
        # w: [3H, in_dim] (gates r,z,n stacked)  ->  [in_pad, 3*Hp], gate-major lanes
        w3 = w.reshape(3, H, in_dim)
        out = jnp.zeros((3, Hp, in_pad), jnp.float32).at[:, :H, :in_dim].set(w3)
        return out.transpose(2, 0, 1).reshape(in_pad, 3 * Hp)

    def pad_gates_b(b):
        b3 = b.reshape(3, H)
        out = jnp.zeros((3, Hp), jnp.float32).at[:, :H].set(b3)
        return out.reshape(1, 3 * Hp)

    wih = jnp.stack([pad_gates_w(p["wih_f"], E, E),
                     pad_gates_w(p["wih_b"], E, E)]).astype(jnp.bfloat16)
    whh = jnp.stack([pad_gates_w(p["whh_f"], H, Hp),
                     pad_gates_w(p["whh_b"], H, Hp)]).astype(jnp.bfloat16)
    bih = jnp.stack([pad_gates_b(p["bih_f"]), pad_gates_b(p["bih_b"])])
    bhh = jnp.stack([pad_gates_b(p["bhh_f"]), pad_gates_b(p["bhh_b"])])

    fcw_f = jnp.zeros((Hp, D), jnp.float32).at[:H, :].set(p["fc_w"][:, :H].T)
    fcw_b = jnp.zeros((Hp, D), jnp.float32).at[:H, :].set(p["fc_w"][:, H:].T)
    fcw = jnp.stack([fcw_f, fcw_b]).astype(jnp.bfloat16)

    return dict(emb=p["emb"], wih=wih, whh=whh, bih=bih, bhh=bhh,
                fcw=fcw, fcb=p["fc_b"], H=H, Hp=Hp, D=D, E=E)


# ----------------------------------------------------------------------------
# Pure-JAX reference (f32) for correctness checking
# ----------------------------------------------------------------------------
def encoder_reference(src, p):
    emb = jnp.take(p["emb"], src, axis=0)
    T, B, _ = emb.shape
    H = p["whh_f"].shape[1]

    def cell(x, h, wih, whh, bih, bhh):
        gi = x @ wih.T + bih
        gh = h @ whh.T + bhh
        r = jax.nn.sigmoid(gi[:, :H] + gh[:, :H])
        z = jax.nn.sigmoid(gi[:, H:2 * H] + gh[:, H:2 * H])
        n = jnp.tanh(gi[:, 2 * H:] + r * gh[:, 2 * H:])
        return (1.0 - z) * n + z * h

    h_f = jnp.zeros((B, H), jnp.float32)
    h_b = jnp.zeros((B, H), jnp.float32)
    outs_f, outs_b = [], [None] * T
    for t in range(T):
        h_f = cell(emb[t], h_f, p["wih_f"], p["whh_f"], p["bih_f"], p["bhh_f"])
        outs_f.append(h_f)
    for t in range(T - 1, -1, -1):
        h_b = cell(emb[t], h_b, p["wih_b"], p["whh_b"], p["bih_b"], p["bhh_b"])
        outs_b[t] = h_b
    outputs = jnp.concatenate([jnp.stack(outs_f), jnp.stack(outs_b)], axis=-1)
    hidden = jnp.tanh(jnp.concatenate([h_f, h_b], axis=-1) @ p["fc_w"].T + p["fc_b"])
    return outputs, hidden


if __name__ == "__main__":
    INPUT_DIM = 50      # vocab size
    EMB_DIM = 32
    ENC_HID = 32
    DEC_HID = 32
    T, B = 8, 2

    key = jax.random.PRNGKey(0)
    kp_, kx_ = jax.random.split(key)
    params = init_params(kp_, INPUT_DIM, EMB_DIM, ENC_HID, DEC_HID)
    kparams = pack_params(params)
    src = jax.random.randint(kx_, (T, B), 0, INPUT_DIM, dtype=jnp.int32)

    # time_block=4 -> 2 time blocks per direction: exercises the pipelined grid
    # and the cross-block hidden-state carry.
    outputs, hidden = jax.block_until_ready(
        encoder_forward(src, kparams, time_block=4))

    ref_out, ref_hid = encoder_reference(src, params)

    assert outputs.shape == (T, B, 2 * ENC_HID)
    assert hidden.shape == (B, DEC_HID)
    assert bool(jnp.all(jnp.isfinite(outputs))) and bool(jnp.all(jnp.isfinite(hidden)))
    # bf16 weights vs f32 reference: generous but meaningful tolerance
    assert float(jnp.max(jnp.abs(outputs - ref_out))) < 0.1
    assert float(jnp.max(jnp.abs(hidden - ref_hid))) < 0.1
    print("KERNEL_OK")
</pallas_src>

<mosaic_0001>
module attributes {stable_mosaic.version = 11 : i64} {
  func.func @gru_encoder_kernel(%arg0: i32, %arg1: i32, %arg2: memref<32x32xbf16, #tpu.memory_space<vmem>>, %arg3: memref<1x32x384xbf16, #tpu.memory_space<vmem>>, %arg4: memref<1x128x384xbf16, #tpu.memory_space<vmem>>, %arg5: memref<1x1x384xf32, #tpu.memory_space<vmem>>, %arg6: memref<1x1x384xf32, #tpu.memory_space<vmem>>, %arg7: memref<1x128x32xbf16, #tpu.memory_space<vmem>>, %arg8: memref<4x8x128xf32, #tpu.memory_space<vmem>>, %arg9: memref<1x8x32xf32, #tpu.memory_space<vmem>>, %arg10: memref<8x128xf32, #tpu.memory_space<vmem>>, %arg11: memref<32x384xf32, #tpu.memory_space<vmem>>) attributes {dimension_semantics = [#tpu.dimension_semantics<parallel>, #tpu.dimension_semantics<arbitrary>], iteration_bounds = array<i64: 2, 2>, scalar_prefetch = 0 : i64, scratch_operands = 2 : i64, tpu.core_type = #tpu.core_type<tc>, window_params = [{transform_indices = @transform_0, window_bounds = array<i64: 32, 32>}, {transform_indices = @transform_1, window_bounds = array<i64: 1, 32, 384>}, {transform_indices = @transform_2, window_bounds = array<i64: 1, 128, 384>}, {transform_indices = @transform_3, window_bounds = array<i64: 1, 1, 384>}, {transform_indices = @transform_4, window_bounds = array<i64: 1, 1, 384>}, {transform_indices = @transform_5, window_bounds = array<i64: 1, 128, 32>}, {transform_indices = @transform_6, window_bounds = array<i64: 4, 8, 128>}, {transform_indices = @transform_7, window_bounds = array<i64: 1, 8, 32>}]} {
    %c0_i32 = arith.constant 0 : i32
    %0 = arith.cmpi eq, %arg1, %c0_i32 : i32
    %1 = arith.extui %0 : i1 to i32
    %c0_i32_0 = arith.constant 0 : i32
    %2 = arith.cmpi ne, %1, %c0_i32_0 : i32
    scf.if %2 {
      %cst_62 = arith.constant 0.000000e+00 : f32
      %187 = vector.broadcast %cst_62 : f32 to vector<8x128xf32>
      %c0_63 = arith.constant 0 : index
      %c0_64 = arith.constant 0 : index
      %188 = vector.load %arg10[%c0_63, %c0_64] : memref<8x128xf32, #tpu.memory_space<vmem>>, vector<8x128xf32>
      tpu.vector_store %arg10[%c0_63, %c0_64], %187 {strides = array<i32>} : memref<8x128xf32, #tpu.memory_space<vmem>>, vector<8x128xf32>,
    } else {
    }
    %c0 = arith.constant 0 : index
    %c0_1 = arith.constant 0 : index
    %3 = vector.load %arg2[%c0, %c0_1] : memref<32x32xbf16, #tpu.memory_space<vmem>>, vector<32x32xbf16>
    %c0_2 = arith.constant 0 : index
    %c0_3 = arith.constant 0 : index
    %c0_4 = arith.constant 0 : index
    %4 = vector.load %arg3[%c0_2, %c0_3, %c0_4] : memref<1x32x384xbf16, #tpu.memory_space<vmem>>, vector<1x32x384xbf16>
    %5 = vector.shape_cast %4 : vector<1x32x384xbf16> to vector<32x384xbf16>
    %cst = arith.constant dense<0.000000e+00> : vector<32x384xf32>
    %6 = tpu.matmul %3, %5, %cst {dimension_numbers = #tpu.dot_dimension_numbers<[1], [0], [0], [1], [0, 0, 1, 1], [], []>} : vector<32x32xbf16>, vector<32x384xbf16>, vector<32x384xf32> -> vector<32x384xf32>
    %c0_5 = arith.constant 0 : index
    %c0_6 = arith.constant 0 : index
    %c0_7 = arith.constant 0 : index
    %7 = vector.load %arg5[%c0_5, %c0_6, %c0_7] : memref<1x1x384xf32, #tpu.memory_space<vmem>>, vector<1x1x384xf32>
    %8 = vector.shape_cast %7 : vector<1x1x384xf32> to vector<1x384xf32>
    %9 = vector.broadcast %8 : vector<1x384xf32> to vector<32x384xf32>
    %10 = arith.addf %6, %9 : vector<32x384xf32>
    %c0_8 = arith.constant 0 : index
    %c0_9 = arith.constant 0 : index
    %11 = vector.load %arg11[%c0_8, %c0_9] : memref<32x384xf32, #tpu.memory_space<vmem>>, vector<32x384xf32>
    tpu.vector_store %arg11[%c0_8, %c0_9], %10 {strides = array<i32>} : memref<32x384xf32, #tpu.memory_space<vmem>>, vector<32x384xf32>,
    %c0_10 = arith.constant 0 : index
    %c0_11 = arith.constant 0 : index
    %c0_12 = arith.constant 0 : index
    %12 = vector.load %arg4[%c0_10, %c0_11, %c0_12] : memref<1x128x384xbf16, #tpu.memory_space<vmem>>, vector<1x128x384xbf16>
    %13 = vector.shape_cast %12 : vector<1x128x384xbf16> to vector<128x384xbf16>
    %c0_13 = arith.constant 0 : index
    %c0_14 = arith.constant 0 : index
    %c0_15 = arith.constant 0 : index
    %14 = vector.load %arg6[%c0_13, %c0_14, %c0_15] : memref<1x1x384xf32, #tpu.memory_space<vmem>>, vector<1x1x384xf32>
    %15 = vector.shape_cast %14 : vector<1x1x384xf32> to vector<1x384xf32>
    %16 = vector.shape_cast %15 : vector<1x384xf32> to vector<1x384xf32>
    %17 = vector.broadcast %16 : vector<1x384xf32> to vector<8x384xf32>
    %c0_16 = arith.constant 0 : index
    %c0_17 = arith.constant 0 : index
    %18 = vector.load %arg10[%c0_16, %c0_17] : memref<8x128xf32, #tpu.memory_space<vmem>>, vector<8x128xf32>
    %c0_i32_18 = arith.constant 0 : i32
    %c2_i32 = arith.constant 2 : i32
    %19 = arith.muli %c2_i32, %c0_i32_18 : i32
    %c3_i32 = arith.constant 3 : i32
    %20 = arith.subi %c3_i32, %19 : i32
    %21 = arith.muli %arg0, %20 : i32
    %22 = arith.addi %c0_i32_18, %21 : i32
    %c8_i32 = arith.constant 8 : i32
    %23 = arith.muli %22, %c8_i32 : i32
    %24 = tpu.assume_multiple %23, 8 : i32
    %25 = arith.index_cast %24 : i32 to index
    %c0_19 = arith.constant 0 : index
    %26 = vector.load %arg11[%25, %c0_19] : memref<32x384xf32, #tpu.memory_space<vmem>>, vector<8x384xf32>
    %27 = arith.truncf %18 : vector<8x128xf32> to vector<8x128xbf16>
    %cst_20 = arith.constant dense<0.000000e+00> : vector<8x384xf32>
    %28 = tpu.matmul %27, %13, %cst_20 {dimension_numbers = #tpu.dot_dimension_numbers<[1], [0], [0], [1], [0, 0, 1, 1], [], []>} : vector<8x128xbf16>, vector<128x384xbf16>, vector<8x384xf32> -> vector<8x384xf32>
    %29 = arith.addf %28, %17 : vector<8x384xf32>
    %30 = vector.extract_strided_slice %26 {offsets = [0, 0], sizes = [8, 128], strides = [1, 1]} : vector<8x384xf32> to vector<8x128xf32>
    %31 = vector.extract_strided_slice %29 {offsets = [0, 0], sizes = [8, 128], strides = [1, 1]} : vector<8x384xf32> to vector<8x128xf32>
    %32 = arith.addf %30, %31 : vector<8x128xf32>
    %33 = arith.negf %32 : vector<8x128xf32>
    %34 = math.exp %33 : vector<8x128xf32>
    %cst_21 = arith.constant 1.000000e+00 : f32
    %35 = vector.broadcast %cst_21 : f32 to vector<8x128xf32>
    %36 = arith.addf %35, %34 : vector<8x128xf32>
    %37 = arith.divf %35, %36 : vector<8x128xf32>
    %38 = vector.extract_strided_slice %26 {offsets = [0, 128], sizes = [8, 128], strides = [1, 1]} : vector<8x384xf32> to vector<8x128xf32>
    %39 = vector.extract_strided_slice %29 {offsets = [0, 128], sizes = [8, 128], strides = [1, 1]} : vector<8x384xf32> to vector<8x128xf32>
    %40 = arith.addf %38, %39 : vector<8x128xf32>
    %41 = arith.negf %40 : vector<8x128xf32>
    %42 = math.exp %41 : vector<8x128xf32>
    %cst_22 = arith.constant 1.000000e+00 : f32
    %43 = vector.broadcast %cst_22 : f32 to vector<8x128xf32>
    %44 = arith.addf %43, %42 : vector<8x128xf32>
    %45 = arith.divf %43, %44 : vector<8x128xf32>
    %46 = vector.extract_strided_slice %26 {offsets = [0, 256], sizes = [8, 128], strides = [1, 1]} : vector<8x384xf32> to vector<8x128xf32>
    %47 = vector.extract_strided_slice %29 {offsets = [0, 256], sizes = [8, 128], strides = [1, 1]} : vector<8x384xf32> to vector<8x128xf32>
    %48 = arith.mulf %37, %47 : vector<8x128xf32>
    %49 = arith.addf %46, %48 : vector<8x128xf32>
    %50 = math.tanh %49 : vector<8x128xf32>
    %cst_23 = arith.constant 1.000000e+00 : f32
    %51 = vector.broadcast %cst_23 : f32 to vector<8x128xf32>
    %52 = arith.subf %51, %45 : vector<8x128xf32>
    %53 = arith.mulf %52, %50 : vector<8x128xf32>
    %54 = arith.mulf %45, %18 : vector<8x128xf32>
    %55 = arith.addf %53, %54 : vector<8x128xf32>
    %56 = arith.index_cast %22 : i32 to index
    %c0_24 = arith.constant 0 : index
    %c0_25 = arith.constant 0 : index
    %57 = vector.load %arg8[%56, %c0_24, %c0_25] : memref<4x8x128xf32, #tpu.memory_space<vmem>>, vector<1x8x128xf32>
    %58 = vector.shape_cast %57 : vector<1x8x128xf32> to vector<8x128xf32>
    %59 = vector.shape_cast %55 : vector<8x128xf32> to vector<1x8x128xf32>
    tpu.vector_store %arg8[%56, %c0_24, %c0_25], %59 {strides = array<i32>} : memref<4x8x128xf32, #tpu.memory_space<vmem>>, vector<1x8x128xf32>,
    %c1_i32 = arith.constant 1 : i32
    %c2_i32_26 = arith.constant 2 : i32
    %60 = arith.muli %c2_i32_26, %c1_i32 : i32
    %c3_i32_27 = arith.constant 3 : i32
    %61 = arith.subi %c3_i32_27, %60 : i32
    %62 = arith.muli %arg0, %61 : i32
    %63 = arith.addi %c1_i32, %62 : i32
    %c8_i32_28 = arith.constant 8 : i32
    %64 = arith.muli %63, %c8_i32_28 : i32
    %65 = tpu.assume_multiple %64, 8 : i32
    %66 = arith.index_cast %65 : i32 to index
    %c0_29 = arith.constant 0 : index
    %67 = vector.load %arg11[%66, %c0_29] : memref<32x384xf32, #tpu.memory_space<vmem>>, vector<8x384xf32>
    %68 = arith.truncf %55 : vector<8x128xf32> to vector<8x128xbf16>
    %cst_30 = arith.constant dense<0.000000e+00> : vector<8x384xf32>
    %69 = tpu.matmul %68, %13, %cst_30 {dimension_numbers = #tpu.dot_dimension_numbers<[1], [0], [0], [1], [0, 0, 1, 1], [], []>} : vector<8x128xbf16>, vector<128x384xbf16>, vector<8x384xf32> -> vector<8x384xf32>
    %70 = arith.addf %69, %17 : vector<8x384xf32>
    %71 = vector.extract_strided_slice %67 {offsets = [0, 0], sizes = [8, 128], strides = [1, 1]} : vector<8x384xf32> to vector<8x128xf32>
    %72 = vector.extract_strided_slice %70 {offsets = [0, 0], sizes = [8, 128], strides = [1, 1]} : vector<8x384xf32> to vector<8x128xf32>
    %73 = arith.addf %71, %72 : vector<8x128xf32>
    %74 = arith.negf %73 : vector<8x128xf32>
    %75 = math.exp %74 : vector<8x128xf32>
    %cst_31 = arith.constant 1.000000e+00 : f32
    %76 = vector.broadcast %cst_31 : f32 to vector<8x128xf32>
    %77 = arith.addf %76, %75 : vector<8x128xf32>
    %78 = arith.divf %76, %77 : vector<8x128xf32>
    %79 = vector.extract_strided_slice %67 {offsets = [0, 128], sizes = [8, 128], strides = [1, 1]} : vector<8x384xf32> to vector<8x128xf32>
    %80 = vector.extract_strided_slice %70 {offsets = [0, 128], sizes = [8, 128], strides = [1, 1]} : vector<8x384xf32> to vector<8x128xf32>
    %81 = arith.addf %79, %80 : vector<8x128xf32>
    %82 = arith.negf %81 : vector<8x128xf32>
    %83 = math.exp %82 : vector<8x128xf32>
    %cst_32 = arith.constant 1.000000e+00 : f32
    %84 = vector.broadcast %cst_32 : f32 to vector<8x128xf32>
    %85 = arith.addf %84, %83 : vector<8x128xf32>
    %86 = arith.divf %84, %85 : vector<8x128xf32>
    %87 = vector.extract_strided_slice %67 {offsets = [0, 256], sizes = [8, 128], strides = [1, 1]} : vector<8x384xf32> to vector<8x128xf32>
    %88 = vector.extract_strided_slice %70 {offsets = [0, 256], sizes = [8, 128], strides = [1, 1]} : vector<8x384xf32> to vector<8x128xf32>
    %89 = arith.mulf %78, %88 : vector<8x128xf32>
    %90 = arith.addf %87, %89 : vector<8x128xf32>
    %91 = math.tanh %90 : vector<8x128xf32>
    %cst_33 = arith.constant 1.000000e+00 : f32
    %92 = vector.broadcast %cst_33 : f32 to vector<8x128xf32>
    %93 = arith.subf %92, %86 : vector<8x128xf32>
    %94 = arith.mulf %93, %91 : vector<8x128xf32>
    %95 = arith.mulf %86, %55 : vector<8x128xf32>
    %96 = arith.addf %94, %95 : vector<8x128xf32>
    %97 = arith.index_cast %63 : i32 to index
    %c0_34 = arith.constant 0 : index
    %c0_35 = arith.constant 0 : index
    %98 = vector.load %arg8[%97, %c0_34, %c0_35] : memref<4x8x128xf32, #tpu.memory_space<vmem>>, vector<1x8x128xf32>
    %99 = vector.shape_cast %98 : vector<1x8x128xf32> to vector<8x128xf32>
    %100 = vector.shape_cast %96 : vector<8x128xf32> to vector<1x8x128xf32>
    tpu.vector_store %arg8[%97, %c0_34, %c0_35], %100 {strides = array<i32>} : memref<4x8x128xf32, #tpu.memory_space<vmem>>, vector<1x8x128xf32>,
    %c2_i32_36 = arith.constant 2 : i32
    %c2_i32_37 = arith.constant 2 : i32
    %101 = arith.muli %c2_i32_37, %c2_i32_36 : i32
    %c3_i32_38 = arith.constant 3 : i32
    %102 = arith.subi %c3_i32_38, %101 : i32
    %103 = arith.muli %arg0, %102 : i32
    %104 = arith.addi %c2_i32_36, %103 : i32
    %c8_i32_39 = arith.constant 8 : i32
    %105 = arith.muli %104, %c8_i32_39 : i32
    %106 = tpu.assume_multiple %105, 8 : i32
    %107 = arith.index_cast %106 : i32 to index
    %c0_40 = arith.constant 0 : index
    %108 = vector.load %arg11[%107, %c0_40] : memref<32x384xf32, #tpu.memory_space<vmem>>, vector<8x384xf32>
    %109 = arith.truncf %96 : vector<8x128xf32> to vector<8x128xbf16>
    %cst_41 = arith.constant dense<0.000000e+00> : vector<8x384xf32>
    %110 = tpu.matmul %109, %13, %cst_41 {dimension_numbers = #tpu.dot_dimension_numbers<[1], [0], [0], [1], [0, 0, 1, 1], [], []>} : vector<8x128xbf16>, vector<128x384xbf16>, vector<8x384xf32> -> vector<8x384xf32>
    %111 = arith.addf %110, %17 : vector<8x384xf32>
    %112 = vector.extract_strided_slice %108 {offsets = [0, 0], sizes = [8, 128], strides = [1, 1]} : vector<8x384xf32> to vector<8x128xf32>
    %113 = vector.extract_strided_slice %111 {offsets = [0, 0], sizes = [8, 128], strides = [1, 1]} : vector<8x384xf32> to vector<8x128xf32>
    %114 = arith.addf %112, %113 : vector<8x128xf32>
    %115 = arith.negf %114 : vector<8x128xf32>
    %116 = math.exp %115 : vector<8x128xf32>
    %cst_42 = arith.constant 1.000000e+00 : f32
    %117 = vector.broadcast %cst_42 : f32 to vector<8x128xf32>
    %118 = arith.addf %117, %116 : vector<8x128xf32>
    %119 = arith.divf %117, %118 : vector<8x128xf32>
    %120 = vector.extract_strided_slice %108 {offsets = [0, 128], sizes = [8, 128], strides = [1, 1]} : vector<8x384xf32> to vector<8x128xf32>
    %121 = vector.extract_strided_slice %111 {offsets = [0, 128], sizes = [8, 128], strides = [1, 1]} : vector<8x384xf32> to vector<8x128xf32>
    %122 = arith.addf %120, %121 : vector<8x128xf32>
    %123 = arith.negf %122 : vector<8x128xf32>
    %124 = math.exp %123 : vector<8x128xf32>
    %cst_43 = arith.constant 1.000000e+00 : f32
    %125 = vector.broadcast %cst_43 : f32 to vector<8x128xf32>
    %126 = arith.addf %125, %124 : vector<8x128xf32>
    %127 = arith.divf %125, %126 : vector<8x128xf32>
    %128 = vector.extract_strided_slice %108 {offsets = [0, 256], sizes = [8, 128], strides = [1, 1]} : vector<8x384xf32> to vector<8x128xf32>
    %129 = vector.extract_strided_slice %111 {offsets = [0, 256], sizes = [8, 128], strides = [1, 1]} : vector<8x384xf32> to vector<8x128xf32>
    %130 = arith.mulf %119, %129 : vector<8x128xf32>
    %131 = arith.addf %128, %130 : vector<8x128xf32>
    %132 = math.tanh %131 : vector<8x128xf32>
    %cst_44 = arith.constant 1.000000e+00 : f32
    %133 = vector.broadcast %cst_44 : f32 to vector<8x128xf32>
    %134 = arith.subf %133, %127 : vector<8x128xf32>
    %135 = arith.mulf %134, %132 : vector<8x128xf32>
    %136 = arith.mulf %127, %96 : vector<8x128xf32>
    %137 = arith.addf %135, %136 : vector<8x128xf32>
    %138 = arith.index_cast %104 : i32 to index
    %c0_45 = arith.constant 0 : index
    %c0_46 = arith.constant 0 : index
    %139 = vector.load %arg8[%138, %c0_45, %c0_46] : memref<4x8x128xf32, #tpu.memory_space<vmem>>, vector<1x8x128xf32>
    %140 = vector.shape_cast %139 : vector<1x8x128xf32> to vector<8x128xf32>
    %141 = vector.shape_cast %137 : vector<8x128xf32> to vector<1x8x128xf32>
    tpu.vector_store %arg8[%138, %c0_45, %c0_46], %141 {strides = array<i32>} : memref<4x8x128xf32, #tpu.memory_space<vmem>>, vector<1x8x128xf32>,
    %c3_i32_47 = arith.constant 3 : i32
    %c2_i32_48 = arith.constant 2 : i32
    %142 = arith.muli %c2_i32_48, %c3_i32_47 : i32
    %c3_i32_49 = arith.constant 3 : i32
    %143 = arith.subi %c3_i32_49, %142 : i32
    %144 = arith.muli %arg0, %143 : i32
    %145 = arith.addi %c3_i32_47, %144 : i32
    %c8_i32_50 = arith.constant 8 : i32
    %146 = arith.muli %145, %c8_i32_50 : i32
    %147 = tpu.assume_multiple %146, 8 : i32
    %148 = arith.index_cast %147 : i32 to index
    %c0_51 = arith.constant 0 : index
    %149 = vector.load %arg11[%148, %c0_51] : memref<32x384xf32, #tpu.memory_space<vmem>>, vector<8x384xf32>
    %150 = arith.truncf %137 : vector<8x128xf32> to vector<8x128xbf16>
    %cst_52 = arith.constant dense<0.000000e+00> : vector<8x384xf32>
    %151 = tpu.matmul %150, %13, %cst_52 {dimension_numbers = #tpu.dot_dimension_numbers<[1], [0], [0], [1], [0, 0, 1, 1], [], []>} : vector<8x128xbf16>, vector<128x384xbf16>, vector<8x384xf32> -> vector<8x384xf32>
    %152 = arith.addf %151, %17 : vector<8x384xf32>
    %153 = vector.extract_strided_slice %149 {offsets = [0, 0], sizes = [8, 128], strides = [1, 1]} : vector<8x384xf32> to vector<8x128xf32>
    %154 = vector.extract_strided_slice %152 {offsets = [0, 0], sizes = [8, 128], strides = [1, 1]} : vector<8x384xf32> to vector<8x128xf32>
    %155 = arith.addf %153, %154 : vector<8x128xf32>
    %156 = arith.negf %155 : vector<8x128xf32>
    %157 = math.exp %156 : vector<8x128xf32>
    %cst_53 = arith.constant 1.000000e+00 : f32
    %158 = vector.broadcast %cst_53 : f32 to vector<8x128xf32>
    %159 = arith.addf %158, %157 : vector<8x128xf32>
    %160 = arith.divf %158, %159 : vector<8x128xf32>
    %161 = vector.extract_strided_slice %149 {offsets = [0, 128], sizes = [8, 128], strides = [1, 1]} : vector<8x384xf32> to vector<8x128xf32>
    %162 = vector.extract_strided_slice %152 {offsets = [0, 128], sizes = [8, 128], strides = [1, 1]} : vector<8x384xf32> to vector<8x128xf32>
    %163 = arith.addf %161, %162 : vector<8x128xf32>
    %164 = arith.negf %163 : vector<8x128xf32>
    %165 = math.exp %164 : vector<8x128xf32>
    %cst_54 = arith.constant 1.000000e+00 : f32
    %166 = vector.broadcast %cst_54 : f32 to vector<8x128xf32>
    %167 = arith.addf %166, %165 : vector<8x128xf32>
    %168 = arith.divf %166, %167 : vector<8x128xf32>
    %169 = vector.extract_strided_slice %149 {offsets = [0, 256], sizes = [8, 128], strides = [1, 1]} : vector<8x384xf32> to vector<8x128xf32>
    %170 = vector.extract_strided_slice %152 {offsets = [0, 256], sizes = [8, 128], strides = [1, 1]} : vector<8x384xf32> to vector<8x128xf32>
    %171 = arith.mulf %160, %170 : vector<8x128xf32>
    %172 = arith.addf %169, %171 : vector<8x128xf32>
    %173 = math.tanh %172 : vector<8x128xf32>
    %cst_55 = arith.constant 1.000000e+00 : f32
    %174 = vector.broadcast %cst_55 : f32 to vector<8x128xf32>
    %175 = arith.subf %174, %168 : vector<8x128xf32>
    %176 = arith.mulf %175, %173 : vector<8x128xf32>
    %177 = arith.mulf %168, %137 : vector<8x128xf32>
    %178 = arith.addf %176, %177 : vector<8x128xf32>
    %179 = arith.index_cast %145 : i32 to index
    %c0_56 = arith.constant 0 : index
    %c0_57 = arith.constant 0 : index
    %180 = vector.load %arg8[%179, %c0_56, %c0_57] : memref<4x8x128xf32, #tpu.memory_space<vmem>>, vector<1x8x128xf32>
    %181 = vector.shape_cast %180 : vector<1x8x128xf32> to vector<8x128xf32>
    %182 = vector.shape_cast %178 : vector<8x128xf32> to vector<1x8x128xf32>
    tpu.vector_store %arg8[%179, %c0_56, %c0_57], %182 {strides = array<i32>} : memref<4x8x128xf32, #tpu.memory_space<vmem>>, vector<1x8x128xf32>,
    %c4_i32 = arith.constant 4 : i32
    %c0_58 = arith.constant 0 : index
    %c0_59 = arith.constant 0 : index
    %183 = vector.load %arg10[%c0_58, %c0_59] : memref<8x128xf32, #tpu.memory_space<vmem>>, vector<8x128xf32>
    tpu.vector_store %arg10[%c0_58, %c0_59], %178 {strides = array<i32>} : memref<8x128xf32, #tpu.memory_space<vmem>>, vector<8x128xf32>,
    %c1_i32_60 = arith.constant 1 : i32
    %184 = arith.cmpi eq, %arg1, %c1_i32_60 : i32
    %185 = arith.extui %184 : i1 to i32
    %c0_i32_61 = arith.constant 0 : i32
    %186 = arith.cmpi ne, %185, %c0_i32_61 : i32
    scf.if %186 {
      %187 = arith.truncf %178 : vector<8x128xf32> to vector<8x128xbf16>
      %c0_62 = arith.constant 0 : index
      %c0_63 = arith.constant 0 : index
      %c0_64 = arith.constant 0 : index
      %188 = vector.load %arg7[%c0_62, %c0_63, %c0_64] : memref<1x128x32xbf16, #tpu.memory_space<vmem>>, vector<1x128x32xbf16>
      %189 = vector.shape_cast %188 : vector<1x128x32xbf16> to vector<128x32xbf16>
      %cst_65 = arith.constant dense<0.000000e+00> : vector<8x32xf32>
      %190 = tpu.matmul %187, %189, %cst_65 {dimension_numbers = #tpu.dot_dimension_numbers<[1], [0], [0], [1], [0, 0, 1, 1], [], []>} : vector<8x128xbf16>, vector<128x32xbf16>, vector<8x32xf32> -> vector<8x32xf32>
      %c0_66 = arith.constant 0 : index
      %c0_67 = arith.constant 0 : index
      %c0_68 = arith.constant 0 : index
      %191 = vector.load %arg9[%c0_66, %c0_67, %c0_68] : memref<1x8x32xf32, #tpu.memory_space<vmem>>, vector<1x8x32xf32>
      %192 = vector.shape_cast %191 : vector<1x8x32xf32> to vector<8x32xf32>
      %193 = vector.shape_cast %190 : vector<8x32xf32> to vector<1x8x32xf32>
      tpu.vector_store %arg9[%c0_66, %c0_67, %c0_68], %193 {strides = array<i32>} : memref<1x8x32xf32, #tpu.memory_space<vmem>>, vector<1x8x32xf32>,
    } else {
    }
    return
  }
  func.func @transform_0(%arg0: i32, %arg1: i32) -> (i32, i32) {
    %c2_i32 = arith.constant 2 : i32
    %0 = arith.muli %c2_i32, %arg1 : i32
    %c1_i32 = arith.constant 1 : i32
    %1 = arith.subi %c1_i32, %0 : i32
    %2 = arith.muli %arg0, %1 : i32
    %3 = arith.addi %arg1, %2 : i32
    %c0_i32 = arith.constant 0 : i32
    %c0_i32_0 = arith.constant 0 : i32
    return %3, %c0_i32 : i32, i32
  }
  func.func @transform_1(%arg0: i32, %arg1: i32) -> (i32, i32, i32) {
    %c0_i32 = arith.constant 0 : i32
    %c0_i32_0 = arith.constant 0 : i32
    %c0_i32_1 = arith.constant 0 : i32
    return %arg0, %c0_i32, %c0_i32_0 : i32, i32, i32
  }
  func.func @transform_2(%arg0: i32, %arg1: i32) -> (i32, i32, i32) {
    %c0_i32 = arith.constant 0 : i32
    %c0_i32_0 = arith.constant 0 : i32
    %c0_i32_1 = arith.constant 0 : i32
    return %arg0, %c0_i32, %c0_i32_0 : i32, i32, i32
  }
  func.func @transform_3(%arg0: i32, %arg1: i32) -> (i32, i32, i32) {
    %c0_i32 = arith.constant 0 : i32
    %c0_i32_0 = arith.constant 0 : i32
    %c0_i32_1 = arith.constant 0 : i32
    return %arg0, %c0_i32, %c0_i32_0 : i32, i32, i32
  }
  func.func @transform_4(%arg0: i32, %arg1: i32) -> (i32, i32, i32) {
    %c0_i32 = arith.constant 0 : i32
    %c0_i32_0 = arith.constant 0 : i32
    %c0_i32_1 = arith.constant 0 : i32
    return %arg0, %c0_i32, %c0_i32_0 : i32, i32, i32
  }
  func.func @transform_5(%arg0: i32, %arg1: i32) -> (i32, i32, i32) {
    %c0_i32 = arith.constant 0 : i32
    %c0_i32_0 = arith.constant 0 : i32
    %c0_i32_1 = arith.constant 0 : i32
    return %arg0, %c0_i32, %c0_i32_0 : i32, i32, i32
  }
  func.func @transform_6(%arg0: i32, %arg1: i32) -> (i32, i32, i32) {
    %c2_i32 = arith.constant 2 : i32
    %0 = arith.muli %c2_i32, %arg1 : i32
    %c1_i32 = arith.constant 1 : i32
    %1 = arith.subi %c1_i32, %0 : i32
    %2 = arith.muli %arg0, %1 : i32
    %3 = arith.addi %arg1, %2 : i32
    %c0_i32 = arith.constant 0 : i32
    %c0_i32_0 = arith.constant 0 : i32
    return %3, %c0_i32, %arg0 : i32, i32, i32
  }
  func.func @transform_7(%arg0: i32, %arg1: i32) -> (i32, i32, i32) {
    %c0_i32 = arith.constant 0 : i32
    %c0_i32_0 = arith.constant 0 : i32
    %c0_i32_1 = arith.constant 0 : i32
    return %arg0, %c0_i32, %c0_i32_0 : i32, i32, i32
  }
}

</mosaic_0001>

<llo_original>
// kernel: tpu_custom_call.1
$region0: #{tpu_custom_call.1}
  #allocation0 [shape = 'u32[]', space=smem, size = 0x4, offset = 0x4, fixed_abs, tag = 'smem constant byte address 0x4 - core index']
  #allocation1 [shape = 'u32[144,128]{1,0:T(1,128)}', space=vmem, size = 0x12000, scoped, tag = 'internal scratch']
  #allocation2 [shape = 'f32[8,128]{1,0:T(8,128)}', space=vmem, size = 0x1000, scoped, tag = 'scratch operand']
  #allocation3 [shape = 'f32[32,384]{1,0:T(8,128)}', space=vmem, size = 0xc000, scoped, tag = 'scratch operand']
  %s0 = inlined_call_operand.vmem [shape: bf16[64,32], index: 0, kind: input, shape index: {}]
  %s1 = inlined_call_operand.vmem [shape: bf16[2,32,384], index: 1, kind: input, shape index: {}]
  %s2 = inlined_call_operand.hbm [shape: bf16[2,128,384], index: 2, kind: input, shape index: {}]
  %s3 = inlined_call_operand.vmem [shape: f32[2,1,384], index: 3, kind: input, shape index: {}]
  %s4 = inlined_call_operand.vmem [shape: f32[2,1,384], index: 4, kind: input, shape index: {}]
  %s5 = inlined_call_operand.vmem [shape: bf16[2,128,32], index: 5, kind: input, shape index: {}]
  %s6 = inlined_call_operand.hbm [shape: f32[8,8,256], index: 6, kind: output, shape index: {0}]
  %s7 = inlined_call_operand.hbm [shape: f32[2,8,32], index: 7, kind: output, shape index: {1}]
  %8 = xla_tuple %s6, %s7
  %s9 = sld [smem:[#allocation0]]
  $region77: #{tpu_custom_call.1} parent=0
    _
  %s11 = ssub.s32 1, %s9
  %s12 = scalar_select 0, %s11, %s9
  $region1: #{tpu_custom_call.1} parent=0
    #allocation4 [shape = 'u8[196608]{0}', space=vmem, size = 0x30000, scoped, tag = 'input window, operand 2']
    #allocation5 [shape = 's32[2]{0}', space=sflag, size = 0x8, scoped, tag = 'scoped memory for tpu_custom_call.1']
    #allocation6 [shape = 's32[2]{0}', space=sflag, size = 0x8, scoped, tag = 'scoped memory for tpu_custom_call.1']
    #allocation7 [shape = 'u8[32768]{0}', space=vmem, size = 0x8000, scoped, tag = 'output window, operand 0']
    #allocation8 [shape = 'u8[8192]{0}', space=vmem, size = 0x2000, scoped, tag = 'output window, operand 1']
    #allocation9 [shape = 's32[2]{0}', space=sflag, size = 0x8, scoped, tag = 'scoped memory for tpu_custom_call.1']
    %13 = vsyncpa [#allocation5], 0
    %s14 = scalar_lea.sflag [#allocation5], 1
    %15 = vsyncpa %s14, 0
    %16 = vsyncpa [#allocation6], 0
    %s17 = scalar_lea.sflag [#allocation6], 1
    %18 = vsyncpa %s17, 0
    %19 = vsyncpa [#allocation9], 0
    %s20 = scalar_lea.sflag [#allocation9], 1
    %21 = vsyncpa %s20, 0
    loop: start=0, step=1, limit=6
    $region2: #{tpu_custom_call.1} parent=1 // loop_pre_header
      _
    $region3: #{tpu_custom_call.1} parent=1 // loop_header
      %s23 = sphi 0, %s27
      %p24 = scmp.ge.s32.totalorder %s23, 6
      %s30 = sphi 0, %s42
      %s31 = sphi 0, %s38
      %s32 = sphi 0, %s30
      %s33 = sphi 0, %s31
      %s34 = sphi 0, %s32
      %s35 = sphi 0, %s33
      %s53 = sphi 0, %s55
      %s56 = sphi 0, %s53
      %s57 = sphi 0, %s56
      %s73 = sphi 0, %s57
      %s79 = sphi 0, %s81
      %s82 = sphi 0, %s79
      %s83 = sphi 0, %s82
      %s99 = sphi 0, %s83
      %s105 = sphi 0, %s107
      %s108 = sphi 0, %s105
      %s109 = sphi 0, %s108
      %s125 = sphi 0, %s109
      %s131 = sphi 0, %s133
      %s134 = sphi 0, %s131
      %s135 = sphi 0, %s134
      %s151 = sphi 0, %s135
      %s157 = sphi 0, %s159
      %s160 = sphi 0, %s157
      %s161 = sphi 0, %s160
      %s177 = sphi 0, %s161
      %s183 = sphi 0, %s185
      %s186 = sphi 0, %s183
      %s187 = sphi 0, %s186
      %s203 = sphi 0, %s187
      %s219 = sphi 0, %s221
      %s222 = sphi 0, %s219
      %s223 = sphi 0, %s222
      %s239 = sphi 0, %s223
      %s245 = sphi 0, %s247
      %s248 = sphi 0, %s245
      %s249 = sphi 0, %s248
      %s265 = sphi 0, %s249
    $region4: #{tpu_custom_call.1} parent=1 // loop_header_branch
      %26 = sbr.rel (%p24) target = $region8
    $region5: #{tpu_custom_call.1} parent=1 // loop_body
      %s28 = ssub.s32 %s23, 1
      %s29 = ssub.s32 %s23, 2
      %s36 = sadd.s32 1, %s31
      %p37 = scmp.ge.s32.totalorder %s36, 2
      %s38 = scalar_select %p37, 0, %s36
      %s39 = sadd.s32 1, %s30
      %s40 = scalar_select %p37, %s39, %s30
      %p41 = scmp.ge.s32.totalorder %s40, 2
      %s42 = scalar_select %p41, 0, %s40
      %s43 = smul.u32 %s31, 2
      %s44 = ssub.s32 1, %s43
      %s45 = smul.u32 %s30, %s44
      %s46 = sadd.s32 %s31, %s45
      %s47 = smul.u32 %s38, 2
      %s48 = ssub.s32 1, %s47
      %s49 = smul.u32 %s42, %s48
      %s50 = sadd.s32 %s38, %s49
      %s51 = ssub.s32 %s46, %s50
      %p52 = scmp.eq.s32.totalorder %s51, 0
      %s54 = sadd.s32 %s53, 1
      %s55 = scalar_select %p52, %s53, %s54
      %p58 = pneg %p52
      %p59 = scmp.eq.s32.totalorder %s23, 3
      %p60 = por %p58, %p59
      %p61 = scmp.ne.s32.totalorder %s53, %s56
      %p62 = scmp.eq.s32.totalorder %s23, 0
      %p63 = por %p61, %p62
      %p64 = scmp.ne.s32.totalorder %s53, %s56
      %p65 = scmp.eq.s32.totalorder %s28, 3
      %p66 = por %p64, %p65
      %p67 = scmp.ne.s32.totalorder %s56, %s57
      %p68 = scmp.eq.s32.totalorder %s28, 0
      %p69 = por %p67, %p68
      %p70 = scmp.ne.s32.totalorder %s56, %s57
      %p71 = scmp.eq.s32.totalorder %s29, 3
      %p72 = por %p70, %p71
      %p74 = scmp.ne.s32.totalorder %s57, %s73
      %p75 = scmp.eq.s32.totalorder %s29, 0
      %p76 = por %p74, %p75
      %s77 = ssub.s32 %s30, %s42
      %p78 = scmp.eq.s32.totalorder %s77, 0
      %s80 = sadd.s32 %s79, 1
      %s81 = scalar_select %p78, %s79, %s80
      %p84 = pneg %p78
      %p85 = scmp.eq.s32.totalorder %s23, 3
      %p86 = por %p84, %p85
      %p87 = scmp.ne.s32.totalorder %s79, %s82
      %p88 = scmp.eq.s32.totalorder %s23, 0
      %p89 = por %p87, %p88
      %p90 = scmp.ne.s32.totalorder %s79, %s82
      %p91 = scmp.eq.s32.totalorder %s28, 3
      %p92 = por %p90, %p91
      %p93 = scmp.ne.s32.totalorder %s82, %s83
      %p94 = scmp.eq.s32.totalorder %s28, 0
      %p95 = por %p93, %p94
      %p96 = scmp.ne.s32.totalorder %s82, %s83
      %p97 = scmp.eq.s32.totalorder %s29, 3
      %p98 = por %p96, %p97
      %p100 = scmp.ne.s32.totalorder %s83, %s99
      %p101 = scmp.eq.s32.totalorder %s29, 0
      %p102 = por %p100, %p101
      %s103 = ssub.s32 %s30, %s42
      %p104 = scmp.eq.s32.totalorder %s103, 0
      %s106 = sadd.s32 %s105, 1
      %s107 = scalar_select %p104, %s105, %s106
      %p110 = pneg %p104
      %p111 = scmp.eq.s32.totalorder %s23, 3
      %p112 = por %p110, %p111
      %p113 = scmp.ne.s32.totalorder %s105, %s108
      %p114 = scmp.eq.s32.totalorder %s23, 0
      %p115 = por %p113, %p114
      %p116 = scmp.ne.s32.totalorder %s105, %s108
      %p117 = scmp.eq.s32.totalorder %s28, 3
      %p118 = por %p116, %p117
      %p119 = scmp.ne.s32.totalorder %s108, %s109
      %p120 = scmp.eq.s32.totalorder %s28, 0
      %p121 = por %p119, %p120
      %p122 = scmp.ne.s32.totalorder %s108, %s109
      %p123 = scmp.eq.s32.totalorder %s29, 3
      %p124 = por %p122, %p123
      %p126 = scmp.ne.s32.totalorder %s109, %s125
      %p127 = scmp.eq.s32.totalorder %s29, 0
      %p128 = por %p126, %p127
      %s129 = ssub.s32 %s30, %s42
      %p130 = scmp.eq.s32.totalorder %s129, 0
      %s132 = sadd.s32 %s131, 1
      %s133 = scalar_select %p130, %s131, %s132
      %p136 = pneg %p130
      %p137 = scmp.eq.s32.totalorder %s23, 3
      %p138 = por %p136, %p137
      %p139 = scmp.ne.s32.totalorder %s131, %s134
      %p140 = scmp.eq.s32.totalorder %s23, 0
      %p141 = por %p139, %p140
      %p142 = scmp.ne.s32.totalorder %s131, %s134
      %p143 = scmp.eq.s32.totalorder %s28, 3
      %p144 = por %p142, %p143
      %p145 = scmp.ne.s32.totalorder %s134, %s135
      %p146 = scmp.eq.s32.totalorder %s28, 0
      %p147 = por %p145, %p146
      %p148 = scmp.ne.s32.totalorder %s134, %s135
      %p149 = scmp.eq.s32.totalorder %s29, 3
      %p150 = por %p148, %p149
      %p152 = scmp.ne.s32.totalorder %s135, %s151
      %p153 = scmp.eq.s32.totalorder %s29, 0
      %p154 = por %p152, %p153
      %s155 = ssub.s32 %s30, %s42
      %p156 = scmp.eq.s32.totalorder %s155, 0
      %s158 = sadd.s32 %s157, 1
      %s159 = scalar_select %p156, %s157, %s158
      %p162 = pneg %p156
      %p163 = scmp.eq.s32.totalorder %s23, 3
      %p164 = por %p162, %p163
      %p165 = scmp.ne.s32.totalorder %s157, %s160
      %p166 = scmp.eq.s32.totalorder %s23, 0
      %p167 = por %p165, %p166
      %p168 = scmp.ne.s32.totalorder %s157, %s160
      %p169 = scmp.eq.s32.totalorder %s28, 3
      %p170 = por %p168, %p169
      %p171 = scmp.ne.s32.totalorder %s160, %s161
      %p172 = scmp.eq.s32.totalorder %s28, 0
      %p173 = por %p171, %p172
      %p174 = scmp.ne.s32.totalorder %s160, %s161
      %p175 = scmp.eq.s32.totalorder %s29, 3
      %p176 = por %p174, %p175
      %p178 = scmp.ne.s32.totalorder %s161, %s177
      %p179 = scmp.eq.s32.totalorder %s29, 0
      %p180 = por %p178, %p179
      %s181 = ssub.s32 %s30, %s42
      %p182 = scmp.eq.s32.totalorder %s181, 0
      %s184 = sadd.s32 %s183, 1
      %s185 = scalar_select %p182, %s183, %s184
      %p188 = pneg %p182
      %p189 = scmp.eq.s32.totalorder %s23, 3
      %p190 = por %p188, %p189
      %p191 = scmp.ne.s32.totalorder %s183, %s186
      %p192 = scmp.eq.s32.totalorder %s23, 0
      %p193 = por %p191, %p192
      %p194 = scmp.ne.s32.totalorder %s183, %s186
      %p195 = scmp.eq.s32.totalorder %s28, 3
      %p196 = por %p194, %p195
      %p197 = scmp.ne.s32.totalorder %s186, %s187
      %p198 = scmp.eq.s32.totalorder %s28, 0
      %p199 = por %p197, %p198
      %p200 = scmp.ne.s32.totalorder %s186, %s187
      %p201 = scmp.eq.s32.totalorder %s29, 3
      %p202 = por %p200, %p201
      %p204 = scmp.ne.s32.totalorder %s187, %s203
      %p205 = scmp.eq.s32.totalorder %s29, 0
      %p206 = por %p204, %p205
      %s207 = smul.u32 %s31, 2
      %s208 = ssub.s32 1, %s207
      %s209 = smul.u32 %s30, %s208
      %s210 = sadd.s32 %s31, %s209
      %s211 = smul.u32 %s38, 2
      %s212 = ssub.s32 1, %s211
      %s213 = smul.u32 %s42, %s212
      %s214 = sadd.s32 %s38, %s213
      %s215 = ssub.s32 %s210, %s214
      %s216 = ssub.s32 %s30, %s42
      %s217 = sor.u32 %s215, %s216
      %p218 = scmp.eq.s32.totalorder %s217, 0
      %s220 = sadd.s32 %s219, 1
      %s221 = scalar_select %p218, %s219, %s220
      %p224 = pneg %p218
      %p225 = scmp.eq.s32.totalorder %s23, 3
      %p226 = por %p224, %p225
      %p227 = scmp.ne.s32.totalorder %s219, %s222
      %p228 = scmp.eq.s32.totalorder %s23, 0
      %p229 = por %p227, %p228
      %p230 = scmp.ne.s32.totalorder %s219, %s222
      %p231 = scmp.eq.s32.totalorder %s28, 3
      %p232 = por %p230, %p231
      %p233 = scmp.ne.s32.totalorder %s222, %s223
      %p234 = scmp.eq.s32.totalorder %s28, 0
      %p235 = por %p233, %p234
      %p236 = scmp.ne.s32.totalorder %s222, %s223
      %p237 = scmp.eq.s32.totalorder %s29, 3
      %p238 = por %p236, %p237
      %p240 = scmp.ne.s32.totalorder %s223, %s239
      %p241 = scmp.eq.s32.totalorder %s29, 0
      %p242 = por %p240, %p241
      %s243 = ssub.s32 %s30, %s42
      %p244 = scmp.eq.s32.totalorder %s243, 0
      %s246 = sadd.s32 %s245, 1
      %s247 = scalar_select %p244, %s245, %s246
      %p250 = pneg %p244
      %p251 = scmp.eq.s32.totalorder %s23, 3
      %p252 = por %p250, %p251
      %p253 = scmp.ne.s32.totalorder %s245, %s248
      %p254 = scmp.eq.s32.totalorder %s23, 0
      %p255 = por %p253, %p254
      %p256 = scmp.ne.s32.totalorder %s245, %s248
      %p257 = scmp.eq.s32.totalorder %s28, 3
      %p258 = por %p256, %p257
      %p259 = scmp.ne.s32.totalorder %s248, %s249
      %p260 = scmp.eq.s32.totalorder %s28, 0
      %p261 = por %p259, %p260
      %p262 = scmp.ne.s32.totalorder %s248, %s249
      %p263 = scmp.eq.s32.totalorder %s29, 3
      %p264 = por %p262, %p263
      %p266 = scmp.ne.s32.totalorder %s249, %s265
      %p267 = scmp.eq.s32.totalorder %s29, 0
      %p268 = por %p266, %p267
      %p269 = scmp.le.s32.totalorder 1, %s23
      %p270 = scmp.lt.s32.totalorder %s23, 5
      %p271 = pnand %p269, %p270
      %p272 = pneg %p271
      // Predicated region
      $region9: #{tpu_custom_call.1} parent=5 // pred_check
        _
      $region10: #{tpu_custom_call.1} parent=5 // pred_check_branch
        %274 = sbr.rel (%p271) target = $region12
      $region11: #{tpu_custom_call.1} parent=5 // pred_region
        %s275 = ssub.s32 %s23, 1
      $region12: #{tpu_custom_call.1} parent=5 // pred_fallthru
        _
      %p276 = scmp.lt.s32.totalorder %s23, 4
      // Predicated region
      $region13: #{tpu_custom_call.1} parent=5 // pred_check
        %p277 = pneg %p276
      $region14: #{tpu_custom_call.1} parent=5 // pred_check_branch
        %279 = sbr.rel (%p277) target = $region16
      $region15: #{tpu_custom_call.1} parent=5 // pred_region
        // Predicated region
        $region17: #{tpu_custom_call.1} parent=15 // pred_check
          %p280 = pneg %p63
        $region18: #{tpu_custom_call.1} parent=15 // pred_check_branch
          %282 = sbr.rel (%p280) target = $region20
        $region19: #{tpu_custom_call.1} parent=15 // pred_region
          %s283 = smul.u32 %s31, 2
          %s284 = ssub.s32 1, %s283
          %s285 = smul.u32 %s30, %s284
          %s286 = sadd.s32 %s31, %s285
          %s287 = smul.u32 4, %s286
          %p288 = scmp.lt.s32.totalorder %s287, 7
          %s289 = scalar_select %p288, %s287, 7
          %s290 = smul.addr %s289, 4
          %s291 = scalar_lea.vmem %s0, %s290
          %s292 = smul.u32 %s31, 2
          %s293 = ssub.s32 1, %s292
          %s294 = smul.u32 %s30, %s293
          %s295 = sadd.s32 %s31, %s294
          %s296 = smul.u32 4, %s295
        $region20: #{tpu_custom_call.1} parent=15 // pred_fallthru
          _
        // Predicated region
        $region21: #{tpu_custom_call.1} parent=15 // pred_check
          %p297 = pneg %p89
        $region22: #{tpu_custom_call.1} parent=15 // pred_check_branch
          %299 = sbr.rel (%p297) target = $region24
        $region23: #{tpu_custom_call.1} parent=15 // pred_region
          %p300 = scmp.lt.s32.totalorder %s30, 1
          %s301 = scalar_select %p300, %s30, 1
          %s302 = smul.addr %s301, 12
          %s303 = smul.addr %s302, 4
          %s304 = scalar_lea.vmem %s1, %s303
        $region24: #{tpu_custom_call.1} parent=15 // pred_fallthru
          _
        // Predicated region
        $region25: #{tpu_custom_call.1} parent=15 // pred_check
          %p305 = pneg %p115
        $region26: #{tpu_custom_call.1} parent=15 // pred_check_branch
          %307 = sbr.rel (%p305) target = $region28
        $region27: #{tpu_custom_call.1} parent=15 // pred_region
          %s308 = sand.u32 %s105, 1
          %s309 = scalar_lea.sflag [#allocation5], %s308
          %s310 = sand.u32 %s105, 1
          %s311 = smul.addr %s310, 192
          %s312 = scalar_lea.vmem [#allocation4], %s311
          %s314 = ssub.s32 3072, 3072
          %315 = vsyncadd %s309, %s314
          %s316 = smul.addr %s30, 48
          %s317 = smul.addr %s316, 64
          %s318 = scalar_lea.hbm %s2, %s317
          %s319 = sshll.u32 %s312, 4
          %s320 = int_to_ptr.vmem [resolvable:$true] %s319
          %325 = dma.hbm_to_vmem [thread:$0]  %s318, 3072, %s320, %s309, 192, 192, 12
        $region28: #{tpu_custom_call.1} parent=15 // pred_fallthru
          _
        // Predicated region
        $region29: #{tpu_custom_call.1} parent=15 // pred_check
          %p326 = pneg %p141
        $region30: #{tpu_custom_call.1} parent=15 // pred_check_branch
          %328 = sbr.rel (%p326) target = $region32
        $region31: #{tpu_custom_call.1} parent=15 // pred_region
          %p329 = scmp.lt.s32.totalorder %s30, 1
          %s330 = scalar_select %p329, %s30, 1
          %s331 = smul.addr %s330, 3
          %s332 = scalar_lea.vmem %s3, %s331
        $region32: #{tpu_custom_call.1} parent=15 // pred_fallthru
          _
        // Predicated region
        $region33: #{tpu_custom_call.1} parent=15 // pred_check
          %p333 = pneg %p167
        $region34: #{tpu_custom_call.1} parent=15 // pred_check_branch
          %335 = sbr.rel (%p333) target = $region36
        $region35: #{tpu_custom_call.1} parent=15 // pred_region
          %p336 = scmp.lt.s32.totalorder %s30, 1
          %s337 = scalar_select %p336, %s30, 1
          %s338 = smul.addr %s337, 3
          %s339 = scalar_lea.vmem %s4, %s338
        $region36: #{tpu_custom_call.1} parent=15 // pred_fallthru
          _
        // Predicated region
        $region37: #{tpu_custom_call.1} parent=15 // pred_check
          %p340 = pneg %p193
        $region38: #{tpu_custom_call.1} parent=15 // pred_check_branch
          %342 = sbr.rel (%p340) target = $region40
        $region39: #{tpu_custom_call.1} parent=15 // pred_region
          %p343 = scmp.lt.s32.totalorder %s30, 1
          %s344 = scalar_select %p343, %s30, 1
          %s345 = smul.addr %s344, 16
          %s346 = smul.addr %s345, 4
          %s347 = scalar_lea.vmem %s5, %s346
        $region40: #{tpu_custom_call.1} parent=15 // pred_fallthru
          _
      $region16: #{tpu_custom_call.1} parent=5 // pred_fallthru
        _
      %p348 = scmp.le.s32.totalorder 1, %s23
      %p349 = scmp.lt.s32.totalorder %s23, 5
      %p350 = pnand %p348, %p349
      %p351 = pneg %p350
      // Predicated region
      $region41: #{tpu_custom_call.1} parent=5 // pred_check
        _
      $region42: #{tpu_custom_call.1} parent=5 // pred_check_branch
        %353 = sbr.rel (%p350) target = $region44
      $region43: #{tpu_custom_call.1} parent=5 // pred_region
        %s354 = ssub.s32 %s23, 1
        %s355 = sand.u32 %s108, 1
        %s356 = scalar_lea.sflag [#allocation5], %s355
        %s357 = sand.u32 %s108, 1
        %s358 = smul.addr %s357, 192
        %s359 = scalar_lea.vmem [#allocation4], %s358
        // Predicated region
        $region45: #{tpu_custom_call.1} parent=43 // pred_check
          %p360 = pneg %p121
        $region46: #{tpu_custom_call.1} parent=43 // pred_check_branch
          %362 = sbr.rel (%p360) target = $region48
        $region47: #{tpu_custom_call.1} parent=43 // pred_region
          %363 = dma.done %s356, 3072
        $region48: #{tpu_custom_call.1} parent=43 // pred_fallthru
          _
        %s364 = smul.u32 %s33, 2
        %s365 = ssub.s32 1, %s364
        %s366 = smul.u32 %s32, %s365
        %s367 = sadd.s32 %s33, %s366
        %s368 = smul.u32 4, %s367
        %p369 = scmp.lt.s32.totalorder %s368, 7
        %s370 = scalar_select %p369, %s368, 7
        %s371 = smul.addr %s370, 4
        %s372 = scalar_lea.vmem %s0, %s371
        %p373 = pneg %p69
        %p374 = pneg %p66
        %p375 = scmp.lt.s32.totalorder %s32, 1
        %s376 = scalar_select %p375, %s32, 1
        %s377 = smul.addr %s376, 12
        %s378 = smul.addr %s377, 4
        %s379 = scalar_lea.vmem %s1, %s378
        %p380 = pneg %p95
        %p381 = pneg %p92
        %s382 = sand.u32 %s108, 1
        %s383 = scalar_lea.sflag [#allocation5], %s382
        %s384 = sand.u32 %s108, 1
        %s385 = smul.addr %s384, 192
        %s386 = scalar_lea.vmem [#allocation4], %s385
        %p387 = pneg %p121
        %p388 = pneg %p118
        %p389 = scmp.lt.s32.totalorder %s32, 1
        %s390 = scalar_select %p389, %s32, 1
        %s391 = smul.addr %s390, 3
        %s392 = scalar_lea.vmem %s3, %s391
        %p393 = pneg %p147
        %p394 = pneg %p144
        %p395 = scmp.lt.s32.totalorder %s32, 1
        %s396 = scalar_select %p395, %s32, 1
        %s397 = smul.addr %s396, 3
        %s398 = scalar_lea.vmem %s4, %s397
        %p399 = pneg %p173
        %p400 = pneg %p170
        %p401 = scmp.lt.s32.totalorder %s32, 1
        %s402 = scalar_select %p401, %s32, 1
        %s403 = smul.addr %s402, 16
        %s404 = smul.addr %s403, 4
        %s405 = scalar_lea.vmem %s5, %s404
        %p406 = pneg %p199
        %p407 = pneg %p196
        %p408 = pneg %p235
        %p409 = pneg %p232
        %s410 = sand.u32 %s222, 1
        %s411 = scalar_lea.sflag [#allocation6], %s410
        %s412 = sand.u32 %s222, 1
        %s413 = smul.addr %s412, 32
        %s414 = scalar_lea.vmem [#allocation7], %s413
        %p415 = pneg %p261
        %p416 = pneg %p258
        %s417 = sand.u32 %s248, 1
        %s418 = scalar_lea.sflag [#allocation9], %s417
        %s419 = sand.u32 %s248, 1
        %s420 = smul.addr %s419, 8
        %s421 = scalar_lea.vmem [#allocation8], %s420
        %s422 = smul.u32 %s33, 2
        %s423 = ssub.s32 1, %s422
        %s424 = smul.u32 %s32, %s423
        %s425 = sadd.s32 %s33, %s424
        %s426 = smul.u32 4, %s425
        %p427 = scmp.lt.s32.totalorder %s426, 7
        %s428 = scalar_select %p427, %s426, 7
        %s429 = smul.addr %s428, 4
        %s430 = scalar_lea.vmem %s0, %s429
        %s431 = smul.u32 %s33, 2
        %s432 = ssub.s32 1, %s431
        %s433 = smul.u32 %s32, %s432
        %s434 = sadd.s32 %s33, %s433
        %s435 = smul.u32 4, %s434
        %p436 = scmp.lt.s32.totalorder %s32, 1
        %s437 = scalar_select %p436, %s32, 1
        %s438 = smul.addr %s437, 12
        %s439 = smul.addr %s438, 4
        %s440 = scalar_lea.vmem %s1, %s439
        %p441 = scmp.lt.s32.totalorder %s32, 1
        %s442 = scalar_select %p441, %s32, 1
        %s443 = smul.addr %s442, 3
        %s444 = scalar_lea.vmem %s3, %s443
        %p445 = scmp.lt.s32.totalorder %s32, 1
        %s446 = scalar_select %p445, %s32, 1
        %s447 = smul.addr %s446, 3
        %s448 = scalar_lea.vmem %s4, %s447
        %p449 = scmp.lt.s32.totalorder %s32, 1
        %s450 = scalar_select %p449, %s32, 1
        %s451 = smul.addr %s450, 16
        %s452 = smul.addr %s451, 4
        %s453 = scalar_lea.vmem %s5, %s452
        %s454 = smul.u32 %s33, 2
        %s455 = ssub.s32 1, %s454
        %s456 = smul.u32 %s32, %s455
        %s457 = sadd.s32 %s33, %s456
        %s458 = smul.u32 4, %s457
        %p460 = scmp.eq.s32.totalorder %s33, 0
        // Predicated region
        $region49: #{tpu_custom_call.1} parent=43 // pred_check
          %p461 = pneg %p460
        $region50: #{tpu_custom_call.1} parent=43 // pred_check_branch
          %463 = sbr.rel (%p461) target = $region52
        $region51: #{tpu_custom_call.1} parent=43 // pred_region
          %464 = vst [vmem:[#allocation2] sm:$0xff] 0.0
        $region52: #{tpu_custom_call.1} parent=43 // pred_fallthru
          _
        %v465 = vld [vmem:[%s430] sm:$0xf]
        %v466 = vld [vmem:[%s430 + $0x4] sm:$0xf]
        %v467 = vld [vmem:[%s430 + $0x8] sm:$0xf]
        %v468 = vld [vmem:[%s430 + $0xc] sm:$0xf]
        %v469 = vld [vmem:[%s440] sm:$0xff]
        %v470 = vld [vmem:[%s440 + $0x8] sm:$0xf]
        %v471 = vld [vmem:[%s440 + $0xc] sm:$0xff]
        %v472 = vld [vmem:[%s440 + $0x14] sm:$0xf]
        %v473 = vld [vmem:[%s440 + $0x18] sm:$0xff]
        %v474 = vld [vmem:[%s440 + $0x20] sm:$0xf]
        %v475 = vld [vmem:[%s440 + $0x24] sm:$0xff]
        %v476 = vld [vmem:[%s440 + $0x2c] sm:$0xf]
        %v477 = vld [vmem:[%s444] sm:$0x7]
        %v479 = vlaneseq
        %v480 = vshrl.u32 %v479, 7
        %v481 = vsub.s32 0, %v480
        %v482 = vrot.slane %v477, %v481
        %v483 = vlaneseq
        %v484 = vshrl.u32 %v483, 7
        %v485 = vsub.s32 1, %v484
        %v486 = vrot.slane %v477, %v485
        %v487 = vlaneseq
        %v488 = vshrl.u32 %v487, 7
        %v489 = vsub.s32 2, %v488
        %v490 = vrot.slane %v477, %v489
        %v498 = vunpack.c.l.b16 %v465
        %v499 = vunpack.c.l.b16 %v466
        %v500 = vunpack.c.l.b16 %v467
        %v501 = vunpack.c.l.b16 %v468
        %v502 = vpack.c.b16 %v499, %v498
        %v503 = vpack.c.b16 %v501, %v500
        %v512 = vunpack.c.l.b16 %v469
        %v513 = vunpack.c.h.b16 %v469
        %v514 = vunpack.c.l.b16 %v470
        %v515 = vunpack.c.l.b16 %v471
        %v516 = vunpack.c.h.b16 %v471
        %v517 = vunpack.c.l.b16 %v472
        %v518 = vunpack.c.l.b16 %v473
        %v519 = vunpack.c.h.b16 %v473
        %v520 = vunpack.c.l.b16 %v474
        %v521 = vunpack.c.l.b16 %v475
        %v522 = vunpack.c.h.b16 %v475
        %v523 = vunpack.c.l.b16 %v476
        %v524 = vpack.c.b16 %v515, %v512
        %v525 = vpack.c.b16 %v516, %v513
        %v526 = vpack.c.b16 %v517, %v514
        %v527 = vpack.c.b16 %v521, %v518
        %v528 = vpack.c.b16 %v522, %v519
        %v529 = vpack.c.b16 %v523, %v520
        %vm536 = vcmask 261120
        %v538 = vsel %vm536, %v502, 0
        %v541 = vsel %vm536, %v503, 0
        %543 = vmatprep.subr.bf16.mxu0 %v525
        %544 = vmatpush1.bf16.msra.mxu0 %v524
        %545 = vmatprep.subr.bf16.mxu0 %v528
        %546 = vmatpush1.bf16.msra.mxu0 %v527
        %547 = vmatprep.subr.bf16.mxu0 0
        %548 = vmatpush1.bf16.msra.mxu0 0
        %549 = vmatprep.subr.bf16.mxu0 0
        %550 = vmatpush1.bf16.msra.mxu0 0
        %551 = vmatprep.subr.bf16.mxu0 0
        %552 = vmatpush1.bf16.msra.mxu0 0
        %553 = vmatprep.subr.bf16.mxu0 0
        %554 = vmatpush1.bf16.msra.mxu0 0
        %555 = vmatprep.subr.bf16.mxu0 0
        %556 = vmatpush1.bf16.msra.mxu0 0
        %557 = vmatprep.subr.bf16.mxu0 0
        %558 = vmatpush1.bf16.msra.mxu0 0
        %559 = vmatprep.subr.bf16.mxu0 0
        %560 = vmatpush1.bf16.msra.mxu0 0
        %561 = vmatprep.subr.bf16.mxu0 0
        %562 = vmatpush1.bf16.msra.mxu0 0
        %563 = vmatprep.subr.bf16.mxu0 0
        %564 = vmatpush1.bf16.msra.mxu0 0
        %565 = vmatprep.subr.bf16.mxu0 0
        %566 = vmatpush1.bf16.msra.mxu0 0
        %567 = vmatprep.subr.bf16.mxu0 0
        %568 = vmatpush1.bf16.msra.mxu0 0
        %569 = vmatprep.subr.bf16.mxu0 0
        %570 = vmatpush1.bf16.msra.mxu0 0
        %571 = vmatprep.subr.bf16.mxu0 0
        %572 = vmatpush1.bf16.msra.mxu0 0
        %573 = vmatprep.subr.bf16.mxu0 0
        %574 = vmatpush1.bf16.msra.mxu0 0
        %575 = vmatprep.mubr.bf16.mxu0 0
        %576 = vmatmul.mubr.bf16.gmra.mrb[0].mxu0 %v538
        %v577 = vpop.f32.mrb[0].mxu0
        %v578 = vadd.f32 %v482, %v577
        %v579 = vpop.f32.mrb[0].mxu0
        %v580 = vadd.f32 %v486, %v579
        %v581 = vpop.f32.mrb[0].mxu0
        %v582 = vadd.f32 %v482, %v581
        %v583 = vpop.f32.mrb[0].mxu0
        %v584 = vadd.f32 %v486, %v583
        %585 = vmatprep.mubr.bf16.mxu0 0
        %586 = vmatmul.mubr.bf16.gmra.mrb[0].mxu0 %v541
        %v587 = vpop.f32.mrb[0].mxu0
        %v588 = vadd.f32 %v482, %v587
        %v589 = vpop.f32.mrb[0].mxu0
        %v590 = vadd.f32 %v486, %v589
        %v591 = vpop.f32.mrb[0].mxu0
        %v592 = vadd.f32 %v482, %v591
        %v593 = vpop.f32.mrb[0].mxu0
        %v594 = vadd.f32 %v486, %v593
        %595 = vdwg.mxu0
        %596 = vmatprep.subr.bf16.mxu0 0
        %597 = vmatpush1.bf16.msra.mxu0 %v526
        %598 = vmatprep.subr.bf16.mxu0 0
        %599 = vmatpush1.bf16.msra.mxu0 %v529
        %600 = vmatprep.subr.bf16.mxu0 0
        %601 = vmatpush1.bf16.msra.mxu0 0
        %602 = vmatprep.subr.bf16.mxu0 0
        %603 = vmatpush1.bf16.msra.mxu0 0
        %604 = vmatprep.subr.bf16.mxu0 0
        %605 = vmatpush1.bf16.msra.mxu0 0
        %606 = vmatprep.subr.bf16.mxu0 0
        %607 = vmatpush1.bf16.msra.mxu0 0
        %608 = vmatprep.subr.bf16.mxu0 0
        %609 = vmatpush1.bf16.msra.mxu0 0
        %610 = vmatprep.subr.bf16.mxu0 0
        %611 = vmatpush1.bf16.msra.mxu0 0
        %612 = vmatprep.subr.bf16.mxu0 0
        %613 = vmatpush1.bf16.msra.mxu0 0
        %614 = vmatprep.subr.bf16.mxu0 0
        %615 = vmatpush1.bf16.msra.mxu0 0
        %616 = vmatprep.subr.bf16.mxu0 0
        %617 = vmatpush1.bf16.msra.mxu0 0
        %618 = vmatprep.subr.bf16.mxu0 0
        %619 = vmatpush1.bf16.msra.mxu0 0
        %620 = vmatprep.subr.bf16.mxu0 0
        %621 = vmatpush1.bf16.msra.mxu0 0
        %622 = vmatprep.subr.bf16.mxu0 0
        %623 = vmatpush1.bf16.msra.mxu0 0
        %624 = vmatprep.subr.bf16.mxu0 0
        %625 = vmatpush1.bf16.msra.mxu0 0
        %626 = vmatprep.subr.bf16.mxu0 0
        %627 = vmatpush1.bf16.msra.mxu0 0
        %628 = vmatprep.mubr.bf16.mxu0 0
        %629 = vmatmul.mubr.bf16.gmra.mrb[0].mxu0 %v538
        %v630 = vpop.f32.mrb[0].mxu0
        %v631 = vadd.f32 %v490, %v630
        %v632 = vpop.f32.mrb[0].mxu0
        %v633 = vpop.f32.mrb[0].mxu0
        %v634 = vadd.f32 %v490, %v633
        %v635 = vpop.f32.mrb[0].mxu0
        %636 = vmatprep.mubr.bf16.mxu0 0
        %637 = vmatmul.mubr.bf16.gmra.mrb[0].mxu0 %v541
        %v638 = vpop.f32.mrb[0].mxu0
        %v639 = vadd.f32 %v490, %v638
        %v640 = vpop.f32.mrb[0].mxu0
        %v641 = vpop.f32.mrb[0].mxu0
        %v642 = vadd.f32 %v490, %v641
        %v643 = vpop.f32.mrb[0].mxu0
        %644 = vdwg.mxu0
        %645 = vst [vmem:[#allocation3] sm:$0xff] %v578
        %646 = vst [vmem:[#allocation3 + $0x8] sm:$0xff] %v580
        %647 = vst [vmem:[#allocation3 + $0x10] sm:$0xff] %v631
        %648 = vst [vmem:[#allocation3 + $0x18] sm:$0xff] %v582
        %649 = vst [vmem:[#allocation3 + $0x20] sm:$0xff] %v584
        %650 = vst [vmem:[#allocation3 + $0x28] sm:$0xff] %v634
        %651 = vst [vmem:[#allocation3 + $0x30] sm:$0xff] %v588
        %652 = vst [vmem:[#allocation3 + $0x38] sm:$0xff] %v590
        %653 = vst [vmem:[#allocation3 + $0x40] sm:$0xff] %v639
        %654 = vst [vmem:[#allocation3 + $0x48] sm:$0xff] %v592
        %655 = vst [vmem:[#allocation3 + $0x50] sm:$0xff] %v594
        %656 = vst [vmem:[#allocation3 + $0x58] sm:$0xff] %v642
        %v657 = vld [vmem:[%s359] sm:$0xff]
        %v658 = vld [vmem:[%s359 + $0x8] sm:$0xf]
        %v659 = vld [vmem:[%s359 + $0xc] sm:$0xff]
        %v660 = vld [vmem:[%s359 + $0x14] sm:$0xf]
        %v661 = vld [vmem:[%s359 + $0x18] sm:$0xff]
        %v662 = vld [vmem:[%s359 + $0x20] sm:$0xf]
        %v663 = vld [vmem:[%s359 + $0x24] sm:$0xff]
        %v664 = vld [vmem:[%s359 + $0x2c] sm:$0xf]
        %v665 = vld [vmem:[%s359 + $0x30] sm:$0xff]
        %v666 = vld [vmem:[%s359 + $0x38] sm:$0xf]
        %v667 = vld [vmem:[%s359 + $0x3c] sm:$0xff]
        %v668 = vld [vmem:[%s359 + $0x44] sm:$0xf]
        %v669 = vld [vmem:[%s359 + $0x48] sm:$0xff]
        %v670 = vld [vmem:[%s359 + $0x50] sm:$0xf]
        %v671 = vld [vmem:[%s359 + $0x54] sm:$0xff]
        %v672 = vld [vmem:[%s359 + $0x5c] sm:$0xf]
        %v673 = vld [vmem:[%s359 + $0x60] sm:$0xff]
        %v674 = vld [vmem:[%s359 + $0x68] sm:$0xf]
        %v675 = vld [vmem:[%s359 + $0x6c] sm:$0xff]
        %v676 = vld [vmem:[%s359 + $0x74] sm:$0xf]
        %v677 = vld [vmem:[%s359 + $0x78] sm:$0xff]
        %v678 = vld [vmem:[%s359 + $0x80] sm:$0xf]
        %v679 = vld [vmem:[%s359 + $0x84] sm:$0xff]
        %v680 = vld [vmem:[%s359 + $0x8c] sm:$0xf]
        %v681 = vld [vmem:[%s359 + $0x90] sm:$0xff]
        %v682 = vld [vmem:[%s359 + $0x98] sm:$0xf]
        %v683 = vld [vmem:[%s359 + $0x9c] sm:$0xff]
        %v684 = vld [vmem:[%s359 + $0xa4] sm:$0xf]
        %v685 = vld [vmem:[%s359 + $0xa8] sm:$0xff]
        %v686 = vld [vmem:[%s359 + $0xb0] sm:$0xf]
        %v687 = vld [vmem:[%s359 + $0xb4] sm:$0xff]
        %v688 = vld [vmem:[%s359 + $0xbc] sm:$0xf]
        %v689 = vld [vmem:[%s448] sm:$0x7]
        %v691 = vlaneseq
        %v692 = vshrl.u32 %v691, 7
        %v693 = vsub.s32 0, %v692
        %v694 = vrot.slane %v689, %v693
        %v695 = vlaneseq
        %v696 = vshrl.u32 %v695, 7
        %v697 = vsub.s32 1, %v696
        %v698 = vrot.slane %v689, %v697
        %v699 = vlaneseq
        %v700 = vshrl.u32 %v699, 7
        %v701 = vsub.s32 2, %v700
        %v702 = vrot.slane %v689, %v701
        %v706 = vld [vmem:[#allocation2] sm:$0xff]
        %s707 = smul.u32 %s32, 3
        %s708 = smul.u32 %s32, 24
        %s709 = sshra.s32 %s708, 3
        %s710 = sand.u32 %s708, 7
        %s711 = smul.u32 %s709, 3
        %s712 = smul.addr %s711, 8
        %s713 = scalar_lea.vmem [#allocation3], %s712
        %v714 = vld [vmem:[%s713] sm:$0xff]
        %v715 = vld [vmem:[%s713 + $0x8] sm:$0xff]
        %v716 = vld [vmem:[%s713 + $0x10] sm:$0xff]
        %v717 = vpack.c.bf16 %v706, %v706
        %v750 = vunpack.c.l.b16 %v657
        %v751 = vunpack.c.h.b16 %v657
        %v752 = vunpack.c.l.b16 %v658
        %v753 = vunpack.c.l.b16 %v659
        %v754 = vunpack.c.h.b16 %v659
        %v755 = vunpack.c.l.b16 %v660
        %v756 = vunpack.c.l.b16 %v661
        %v757 = vunpack.c.h.b16 %v661
        %v758 = vunpack.c.l.b16 %v662
        %v759 = vunpack.c.l.b16 %v663
        %v760 = vunpack.c.h.b16 %v663
        %v761 = vunpack.c.l.b16 %v664
        %v762 = vunpack.c.l.b16 %v665
        %v763 = vunpack.c.h.b16 %v665
        %v764 = vunpack.c.l.b16 %v666
        %v765 = vunpack.c.l.b16 %v667
        %v766 = vunpack.c.h.b16 %v667
        %v767 = vunpack.c.l.b16 %v668
        %v768 = vunpack.c.l.b16 %v669
        %v769 = vunpack.c.h.b16 %v669
        %v770 = vunpack.c.l.b16 %v670
        %v771 = vunpack.c.l.b16 %v671
        %v772 = vunpack.c.h.b16 %v671
        %v773 = vunpack.c.l.b16 %v672
        %v774 = vunpack.c.l.b16 %v673
        %v775 = vunpack.c.h.b16 %v673
        %v776 = vunpack.c.l.b16 %v674
        %v777 = vunpack.c.l.b16 %v675
        %v778 = vunpack.c.h.b16 %v675
        %v779 = vunpack.c.l.b16 %v676
        %v780 = vunpack.c.l.b16 %v677
        %v781 = vunpack.c.h.b16 %v677
        %v782 = vunpack.c.l.b16 %v678
        %v783 = vunpack.c.l.b16 %v679
        %v784 = vunpack.c.h.b16 %v679
        %v785 = vunpack.c.l.b16 %v680
        %v786 = vunpack.c.l.b16 %v681
        %v787 = vunpack.c.h.b16 %v681
        %v788 = vunpack.c.l.b16 %v682
        %v789 = vunpack.c.l.b16 %v683
        %v790 = vunpack.c.h.b16 %v683
        %v791 = vunpack.c.l.b16 %v684
        %v792 = vunpack.c.l.b16 %v685
        %v793 = vunpack.c.h.b16 %v685
        %v794 = vunpack.c.l.b16 %v686
        %v795 = vunpack.c.l.b16 %v687
        %v796 = vunpack.c.h.b16 %v687
        %v797 = vunpack.c.l.b16 %v688
        %v798 = vpack.c.b16 %v753, %v750
        %v799 = vpack.c.b16 %v754, %v751
        %v800 = vpack.c.b16 %v755, %v752
        %v801 = vpack.c.b16 %v759, %v756
        %v802 = vpack.c.b16 %v760, %v757
        %v803 = vpack.c.b16 %v761, %v758
        %v804 = vpack.c.b16 %v765, %v762
        %v805 = vpack.c.b16 %v766, %v763
        %v806 = vpack.c.b16 %v767, %v764
        %v807 = vpack.c.b16 %v771, %v768
        %v808 = vpack.c.b16 %v772, %v769
        %v809 = vpack.c.b16 %v773, %v770
        %v810 = vpack.c.b16 %v777, %v774
        %v811 = vpack.c.b16 %v778, %v775
        %v812 = vpack.c.b16 %v779, %v776
        %v813 = vpack.c.b16 %v783, %v780
        %v814 = vpack.c.b16 %v784, %v781
        %v815 = vpack.c.b16 %v785, %v782
        %v816 = vpack.c.b16 %v789, %v786
        %v817 = vpack.c.b16 %v790, %v787
        %v818 = vpack.c.b16 %v791, %v788
        %v819 = vpack.c.b16 %v795, %v792
        %v820 = vpack.c.b16 %v796, %v793
        %v821 = vpack.c.b16 %v797, %v794
        %846 = vmatprep.subr.bf16.mxu0 %v799
        %847 = vmatpush1.bf16.msra.mxu0 %v798
        %848 = vmatprep.subr.bf16.mxu0 %v802
        %849 = vmatpush1.bf16.msra.mxu0 %v801
        %850 = vmatprep.subr.bf16.mxu0 %v805
        %851 = vmatpush1.bf16.msra.mxu0 %v804
        %852 = vmatprep.subr.bf16.mxu0 %v808
        %853 = vmatpush1.bf16.msra.mxu0 %v807
        %854 = vmatprep.subr.bf16.mxu0 %v811
        %855 = vmatpush1.bf16.msra.mxu0 %v810
        %856 = vmatprep.subr.bf16.mxu0 %v814
        %857 = vmatpush1.bf16.msra.mxu0 %v813
        %858 = vmatprep.subr.bf16.mxu0 %v817
        %859 = vmatpush1.bf16.msra.mxu0 %v816
        %860 = vmatprep.subr.bf16.mxu0 %v820
        %861 = vmatpush1.bf16.msra.mxu0 %v819
        %862 = vmatprep.subr.bf16.mxu0 0
        %863 = vmatpush1.bf16.msra.mxu0 0
        %864 = vmatprep.subr.bf16.mxu0 0
        %865 = vmatpush1.bf16.msra.mxu0 0
        %866 = vmatprep.subr.bf16.mxu0 0
        %867 = vmatpush1.bf16.msra.mxu0 0
        %868 = vmatprep.subr.bf16.mxu0 0
        %869 = vmatpush1.bf16.msra.mxu0 0
        %870 = vmatprep.subr.bf16.mxu0 0
        %871 = vmatpush1.bf16.msra.mxu0 0
        %872 = vmatprep.subr.bf16.mxu0 0
        %873 = vmatpush1.bf16.msra.mxu0 0
        %874 = vmatprep.subr.bf16.mxu0 0
        %875 = vmatpush1.bf16.msra.mxu0 0
        %876 = vmatprep.subr.bf16.mxu0 0
        %877 = vmatpush1.bf16.msra.mxu0 0
        %878 = vmatprep.mubr.bf16.mxu0 0
        %879 = vmatmul.mubr.bf16.gmra.mrb[0].mxu0 %v717
        %v880 = vpop.f32.mrb[0].mxu0
        %v881 = vadd.f32 %v694, %v880
        %v882 = vpop.f32.mrb[0].mxu0
        %v883 = vadd.f32 %v698, %v882
        %v884 = vpop.f32.mrb[0].mxu0
        %v885 = vpop.f32.mrb[0].mxu0
        %886 = vdwg.mxu0
        %887 = vmatprep.subr.bf16.mxu0 0
        %888 = vmatpush1.bf16.msra.mxu0 %v800
        %889 = vmatprep.subr.bf16.mxu0 0
        %890 = vmatpush1.bf16.msra.mxu0 %v803
        %891 = vmatprep.subr.bf16.mxu0 0
        %892 = vmatpush1.bf16.msra.mxu0 %v806
        %893 = vmatprep.subr.bf16.mxu0 0
        %894 = vmatpush1.bf16.msra.mxu0 %v809
        %895 = vmatprep.subr.bf16.mxu0 0
        %896 = vmatpush1.bf16.msra.mxu0 %v812
        %897 = vmatprep.subr.bf16.mxu0 0
        %898 = vmatpush1.bf16.msra.mxu0 %v815
        %899 = vmatprep.subr.bf16.mxu0 0
        %900 = vmatpush1.bf16.msra.mxu0 %v818
        %901 = vmatprep.subr.bf16.mxu0 0
        %902 = vmatpush1.bf16.msra.mxu0 %v821
        %903 = vmatprep.subr.bf16.mxu0 0
        %904 = vmatpush1.bf16.msra.mxu0 0
        %905 = vmatprep.subr.bf16.mxu0 0
        %906 = vmatpush1.bf16.msra.mxu0 0
        %907 = vmatprep.subr.bf16.mxu0 0
        %908 = vmatpush1.bf16.msra.mxu0 0
        %909 = vmatprep.subr.bf16.mxu0 0
        %910 = vmatpush1.bf16.msra.mxu0 0
        %911 = vmatprep.subr.bf16.mxu0 0
        %912 = vmatpush1.bf16.msra.mxu0 0
        %913 = vmatprep.subr.bf16.mxu0 0
        %914 = vmatpush1.bf16.msra.mxu0 0
        %915 = vmatprep.subr.bf16.mxu0 0
        %916 = vmatpush1.bf16.msra.mxu0 0
        %917 = vmatprep.subr.bf16.mxu0 0
        %918 = vmatpush1.bf16.msra.mxu0 0
        %919 = vmatprep.mubr.bf16.mxu0 0
        %920 = vmatmul.mubr.bf16.gmra.mrb[0].mxu0 %v717
        %v921 = vpop.f32.mrb[0].mxu0
        %v922 = vadd.f32 %v702, %v921
        %v923 = vpop.f32.mrb[0].mxu0
        %v924 = vpop.f32.mrb[0].mxu0
        %v925 = vpop.f32.mrb[0].mxu0
        %926 = vdwg.mxu0
        %v927 = vadd.f32 %v714, %v881
        %v928 = vxor.u32 %v927, 2147483648
        %v929 = vmul.f32 %v928, 1.442695
        %v930 = vpow.pop %v929
        %v931 = vadd.f32 %v930, 1.0
        %v932 = vrcp.pop %v931
        %v933 = vmul.f32 1.0, %v932
        %v934 = vadd.f32 %v715, %v883
        %v935 = vxor.u32 %v934, 2147483648
        %v936 = vmul.f32 %v935, 1.442695
        %v937 = vpow.pop %v936
        %v938 = vadd.f32 %v937, 1.0
        %v939 = vrcp.pop %v938
        %v940 = vmul.f32 1.0, %v939
        %v941 = vmul.f32 %v933, %v922
        %v942 = vadd.f32 %v716, %v941
        %v943 = vtanh.pop %v942
        %v944 = vsub.f32 1.0, %v940
        %v945 = vmul.f32 %v944, %v943
        %v946 = vmul.f32 %v940, %v706
        %v947 = vadd.f32 %v945, %v946
        %s948 = smul.u32 %s707, 8
        %s949 = scalar_lea.vmem %s414, %s948 [#allocation7]
        %950 = vst [vmem:[%s949] sm:$0xff] %v947
        %s951 = sadd.s32 %s32, 1
        %s952 = smul.u32 %s951, 8
        %s953 = sshra.s32 %s952, 3
        %s954 = sand.u32 %s952, 7
        %s955 = smul.u32 %s953, 3
        %s956 = smul.addr %s955, 8
        %s957 = scalar_lea.vmem [#allocation3], %s956
        %v958 = vld [vmem:[%s957] sm:$0xff]
        %v959 = vld [vmem:[%s957 + $0x8] sm:$0xff]
        %v960 = vld [vmem:[%s957 + $0x10] sm:$0xff]
        %v961 = vpack.c.bf16 %v947, %v947
        %962 = vmatprep.subr.bf16.mxu0 %v799
        %963 = vmatpush1.bf16.msra.mxu0 %v798
        %964 = vmatprep.subr.bf16.mxu0 %v802
        %965 = vmatpush1.bf16.msra.mxu0 %v801
        %966 = vmatprep.subr.bf16.mxu0 %v805
        %967 = vmatpush1.bf16.msra.mxu0 %v804
        %968 = vmatprep.subr.bf16.mxu0 %v808
        %969 = vmatpush1.bf16.msra.mxu0 %v807
        %970 = vmatprep.subr.bf16.mxu0 %v811
        %971 = vmatpush1.bf16.msra.mxu0 %v810
        %972 = vmatprep.subr.bf16.mxu0 %v814
        %973 = vmatpush1.bf16.msra.mxu0 %v813
        %974 = vmatprep.subr.bf16.mxu0 %v817
        %975 = vmatpush1.bf16.msra.mxu0 %v816
        %976 = vmatprep.subr.bf16.mxu0 %v820
        %977 = vmatpush1.bf16.msra.mxu0 %v819
        %978 = vmatprep.subr.bf16.mxu0 0
        %979 = vmatpush1.bf16.msra.mxu0 0
        %980 = vmatprep.subr.bf16.mxu0 0
        %981 = vmatpush1.bf16.msra.mxu0 0
        %982 = vmatprep.subr.bf16.mxu0 0
        %983 = vmatpush1.bf16.msra.mxu0 0
        %984 = vmatprep.subr.bf16.mxu0 0
        %985 = vmatpush1.bf16.msra.mxu0 0
        %986 = vmatprep.subr.bf16.mxu0 0
        %987 = vmatpush1.bf16.msra.mxu0 0
        %988 = vmatprep.subr.bf16.mxu0 0
        %989 = vmatpush1.bf16.msra.mxu0 0
        %990 = vmatprep.subr.bf16.mxu0 0
        %991 = vmatpush1.bf16.msra.mxu0 0
        %992 = vmatprep.subr.bf16.mxu0 0
        %993 = vmatpush1.bf16.msra.mxu0 0
        %994 = vmatprep.mubr.bf16.mxu0 0
        %995 = vmatmul.mubr.bf16.gmra.mrb[0].mxu0 %v961
        %v996 = vpop.f32.mrb[0].mxu0
        %v997 = vadd.f32 %v694, %v996
        %v998 = vpop.f32.mrb[0].mxu0
        %v999 = vadd.f32 %v698, %v998
        %v1000 = vpop.f32.mrb[0].mxu0
        %v1001 = vpop.f32.mrb[0].mxu0
        %1002 = vdwg.mxu0
        %1003 = vmatprep.subr.bf16.mxu0 0
        %1004 = vmatpush1.bf16.msra.mxu0 %v800
        %1005 = vmatprep.subr.bf16.mxu0 0
        %1006 = vmatpush1.bf16.msra.mxu0 %v803
        %1007 = vmatprep.subr.bf16.mxu0 0
        %1008 = vmatpush1.bf16.msra.mxu0 %v806
        %1009 = vmatprep.subr.bf16.mxu0 0
        %1010 = vmatpush1.bf16.msra.mxu0 %v809
        %1011 = vmatprep.subr.bf16.mxu0 0
        %1012 = vmatpush1.bf16.msra.mxu0 %v812
        %1013 = vmatprep.subr.bf16.mxu0 0
        %1014 = vmatpush1.bf16.msra.mxu0 %v815
        %1015 = vmatprep.subr.bf16.mxu0 0
        %1016 = vmatpush1.bf16.msra.mxu0 %v818
        %1017 = vmatprep.subr.bf16.mxu0 0
        %1018 = vmatpush1.bf16.msra.mxu0 %v821
        %1019 = vmatprep.subr.bf16.mxu0 0
        %1020 = vmatpush1.bf16.msra.mxu0 0
        %1021 = vmatprep.subr.bf16.mxu0 0
        %1022 = vmatpush1.bf16.msra.mxu0 0
        %1023 = vmatprep.subr.bf16.mxu0 0
        %1024 = vmatpush1.bf16.msra.mxu0 0
        %1025 = vmatprep.subr.bf16.mxu0 0
        %1026 = vmatpush1.bf16.msra.mxu0 0
        %1027 = vmatprep.subr.bf16.mxu0 0
        %1028 = vmatpush1.bf16.msra.mxu0 0
        %1029 = vmatprep.subr.bf16.mxu0 0
        %1030 = vmatpush1.bf16.msra.mxu0 0
        %1031 = vmatprep.subr.bf16.mxu0 0
        %1032 = vmatpush1.bf16.msra.mxu0 0
        %1033 = vmatprep.subr.bf16.mxu0 0
        %1034 = vmatpush1.bf16.msra.mxu0 0
        %1035 = vmatprep.mubr.bf16.mxu0 0
        %1036 = vmatmul.mubr.bf16.gmra.mrb[0].mxu0 %v961
        %v1037 = vpop.f32.mrb[0].mxu0
        %v1038 = vadd.f32 %v702, %v1037
        %v1039 = vpop.f32.mrb[0].mxu0
        %v1040 = vpop.f32.mrb[0].mxu0
        %v1041 = vpop.f32.mrb[0].mxu0
        %1042 = vdwg.mxu0
        %v1043 = vadd.f32 %v958, %v997
        %v1044 = vxor.u32 %v1043, 2147483648
        %v1045 = vmul.f32 %v1044, 1.442695
        %v1046 = vpow.pop %v1045
        %v1047 = vadd.f32 %v1046, 1.0
        %v1048 = vrcp.pop %v1047
        %v1049 = vmul.f32 1.0, %v1048
        %v1050 = vadd.f32 %v959, %v999
        %v1051 = vxor.u32 %v1050, 2147483648
        %v1052 = vmul.f32 %v1051, 1.442695
        %v1053 = vpow.pop %v1052
        %v1054 = vadd.f32 %v1053, 1.0
        %v1055 = vrcp.pop %v1054
        %v1056 = vmul.f32 1.0, %v1055
        %v1057 = vmul.f32 %v1049, %v1038
        %v1058 = vadd.f32 %v960, %v1057
        %v1059 = vtanh.pop %v1058
        %v1060 = vsub.f32 1.0, %v1056
        %v1061 = vmul.f32 %v1060, %v1059
        %v1062 = vmul.f32 %v1056, %v947
        %v1063 = vadd.f32 %v1061, %v1062
        %s1064 = scalar_lea.vmem %s414, %s952 [#allocation7]
        %1065 = vst [vmem:[%s1064] sm:$0xff] %v1063
        %s1066 = ssub.s32 2, %s32
        %s1067 = smul.u32 %s1066, 8
        %s1068 = sshra.s32 %s1067, 3
        %s1069 = sand.u32 %s1067, 7
        %s1070 = smul.u32 %s1068, 3
        %s1071 = smul.addr %s1070, 8
        %s1072 = scalar_lea.vmem [#allocation3], %s1071
        %v1073 = vld [vmem:[%s1072] sm:$0xff]
        %v1074 = vld [vmem:[%s1072 + $0x8] sm:$0xff]
        %v1075 = vld [vmem:[%s1072 + $0x10] sm:$0xff]
        %v1076 = vpack.c.bf16 %v1063, %v1063
        %1077 = vmatprep.subr.bf16.mxu0 %v799
        %1078 = vmatpush1.bf16.msra.mxu0 %v798
        %1079 = vmatprep.subr.bf16.mxu0 %v802
        %1080 = vmatpush1.bf16.msra.mxu0 %v801
        %1081 = vmatprep.subr.bf16.mxu0 %v805
        %1082 = vmatpush1.bf16.msra.mxu0 %v804
        %1083 = vmatprep.subr.bf16.mxu0 %v808
        %1084 = vmatpush1.bf16.msra.mxu0 %v807
        %1085 = vmatprep.subr.bf16.mxu0 %v811
        %1086 = vmatpush1.bf16.msra.mxu0 %v810
        %1087 = vmatprep.subr.bf16.mxu0 %v814
        %1088 = vmatpush1.bf16.msra.mxu0 %v813
        %1089 = vmatprep.subr.bf16.mxu0 %v817
        %1090 = vmatpush1.bf16.msra.mxu0 %v816
        %1091 = vmatprep.subr.bf16.mxu0 %v820
        %1092 = vmatpush1.bf16.msra.mxu0 %v819
        %1093 = vmatprep.subr.bf16.mxu0 0
        %1094 = vmatpush1.bf16.msra.mxu0 0
        %1095 = vmatprep.subr.bf16.mxu0 0
        %1096 = vmatpush1.bf16.msra.mxu0 0
        %1097 = vmatprep.subr.bf16.mxu0 0
        %1098 = vmatpush1.bf16.msra.mxu0 0
        %1099 = vmatprep.subr.bf16.mxu0 0
        %1100 = vmatpush1.bf16.msra.mxu0 0
        %1101 = vmatprep.subr.bf16.mxu0 0
        %1102 = vmatpush1.bf16.msra.mxu0 0
        %1103 = vmatprep.subr.bf16.mxu0 0
        %1104 = vmatpush1.bf16.msra.mxu0 0
        %1105 = vmatprep.subr.bf16.mxu0 0
        %1106 = vmatpush1.bf16.msra.mxu0 0
        %1107 = vmatprep.subr.bf16.mxu0 0
        %1108 = vmatpush1.bf16.msra.mxu0 0
        %1109 = vmatprep.mubr.bf16.mxu0 0
        %1110 = vmatmul.mubr.bf16.gmra.mrb[0].mxu0 %v1076
        %v1111 = vpop.f32.mrb[0].mxu0
        %v1112 = vadd.f32 %v694, %v1111
        %v1113 = vpop.f32.mrb[0].mxu0
        %v1114 = vadd.f32 %v698, %v1113
        %v1115 = vpop.f32.mrb[0].mxu0
        %v1116 = vpop.f32.mrb[0].mxu0
        %1117 = vdwg.mxu0
        %1118 = vmatprep.subr.bf16.mxu0 0
        %1119 = vmatpush1.bf16.msra.mxu0 %v800
        %1120 = vmatprep.subr.bf16.mxu0 0
        %1121 = vmatpush1.bf16.msra.mxu0 %v803
        %1122 = vmatprep.subr.bf16.mxu0 0
        %1123 = vmatpush1.bf16.msra.mxu0 %v806
        %1124 = vmatprep.subr.bf16.mxu0 0
        %1125 = vmatpush1.bf16.msra.mxu0 %v809
        %1126 = vmatprep.subr.bf16.mxu0 0
        %1127 = vmatpush1.bf16.msra.mxu0 %v812
        %1128 = vmatprep.subr.bf16.mxu0 0
        %1129 = vmatpush1.bf16.msra.mxu0 %v815
        %1130 = vmatprep.subr.bf16.mxu0 0
        %1131 = vmatpush1.bf16.msra.mxu0 %v818
        %1132 = vmatprep.subr.bf16.mxu0 0
        %1133 = vmatpush1.bf16.msra.mxu0 %v821
        %1134 = vmatprep.subr.bf16.mxu0 0
        %1135 = vmatpush1.bf16.msra.mxu0 0
        %1136 = vmatprep.subr.bf16.mxu0 0
        %1137 = vmatpush1.bf16.msra.mxu0 0
        %1138 = vmatprep.subr.bf16.mxu0 0
        %1139 = vmatpush1.bf16.msra.mxu0 0
        %1140 = vmatprep.subr.bf16.mxu0 0
        %1141 = vmatpush1.bf16.msra.mxu0 0
        %1142 = vmatprep.subr.bf16.mxu0 0
        %1143 = vmatpush1.bf16.msra.mxu0 0
        %1144 = vmatprep.subr.bf16.mxu0 0
        %1145 = vmatpush1.bf16.msra.mxu0 0
        %1146 = vmatprep.subr.bf16.mxu0 0
        %1147 = vmatpush1.bf16.msra.mxu0 0
        %1148 = vmatprep.subr.bf16.mxu0 0
        %1149 = vmatpush1.bf16.msra.mxu0 0
        %1150 = vmatprep.mubr.bf16.mxu0 0
        %1151 = vmatmul.mubr.bf16.gmra.mrb[0].mxu0 %v1076
        %v1152 = vpop.f32.mrb[0].mxu0
        %v1153 = vadd.f32 %v702, %v1152
        %v1154 = vpop.f32.mrb[0].mxu0
        %v1155 = vpop.f32.mrb[0].mxu0
        %v1156 = vpop.f32.mrb[0].mxu0
        %1157 = vdwg.mxu0
        %v1158 = vadd.f32 %v1073, %v1112
        %v1159 = vxor.u32 %v1158, 2147483648
        %v1160 = vmul.f32 %v1159, 1.442695
        %v1161 = vpow.pop %v1160
        %v1162 = vadd.f32 %v1161, 1.0
        %v1163 = vrcp.pop %v1162
        %v1164 = vmul.f32 1.0, %v1163
        %v1165 = vadd.f32 %v1074, %v1114
        %v1166 = vxor.u32 %v1165, 2147483648
        %v1167 = vmul.f32 %v1166, 1.442695
        %v1168 = vpow.pop %v1167
        %v1169 = vadd.f32 %v1168, 1.0
        %v1170 = vrcp.pop %v1169
        %v1171 = vmul.f32 1.0, %v1170
        %v1172 = vmul.f32 %v1164, %v1153
        %v1173 = vadd.f32 %v1075, %v1172
        %v1174 = vtanh.pop %v1173
        %v1175 = vsub.f32 1.0, %v1171
        %v1176 = vmul.f32 %v1175, %v1174
        %v1177 = vmul.f32 %v1171, %v1063
        %v1178 = vadd.f32 %v1176, %v1177
        %s1179 = scalar_lea.vmem %s414, %s1067 [#allocation7]
        %1180 = vst [vmem:[%s1179] sm:$0xff] %v1178
        %s1181 = smul.u32 %s32, 4294967293
        %s1182 = sadd.s32 %s1181, 3
        %s1183 = smul.u32 %s1182, 8
        %s1184 = sshra.s32 %s1183, 3
        %s1185 = sand.u32 %s1183, 7
        %s1186 = smul.u32 %s1184, 3
        %s1187 = smul.addr %s1186, 8
        %s1188 = scalar_lea.vmem [#allocation3], %s1187
        %v1189 = vld [vmem:[%s1188] sm:$0xff]
        %v1190 = vld [vmem:[%s1188 + $0x8] sm:$0xff]
        %v1191 = vld [vmem:[%s1188 + $0x10] sm:$0xff]
        %v1192 = vpack.c.bf16 %v1178, %v1178
        %1193 = vmatprep.subr.bf16.mxu0 %v799
        %1194 = vmatpush1.bf16.msra.mxu0 %v798
        %1195 = vmatprep.subr.bf16.mxu0 %v802
        %1196 = vmatpush1.bf16.msra.mxu0 %v801
        %1197 = vmatprep.subr.bf16.mxu0 %v805
        %1198 = vmatpush1.bf16.msra.mxu0 %v804
        %1199 = vmatprep.subr.bf16.mxu0 %v808
        %1200 = vmatpush1.bf16.msra.mxu0 %v807
        %1201 = vmatprep.subr.bf16.mxu0 %v811
        %1202 = vmatpush1.bf16.msra.mxu0 %v810
        %1203 = vmatprep.subr.bf16.mxu0 %v814
        %1204 = vmatpush1.bf16.msra.mxu0 %v813
        %1205 = vmatprep.subr.bf16.mxu0 %v817
        %1206 = vmatpush1.bf16.msra.mxu0 %v816
        %1207 = vmatprep.subr.bf16.mxu0 %v820
        %1208 = vmatpush1.bf16.msra.mxu0 %v819
        %1209 = vmatprep.subr.bf16.mxu0 0
        %1210 = vmatpush1.bf16.msra.mxu0 0
        %1211 = vmatprep.subr.bf16.mxu0 0
        %1212 = vmatpush1.bf16.msra.mxu0 0
        %1213 = vmatprep.subr.bf16.mxu0 0
        %1214 = vmatpush1.bf16.msra.mxu0 0
        %1215 = vmatprep.subr.bf16.mxu0 0
        %1216 = vmatpush1.bf16.msra.mxu0 0
        %1217 = vmatprep.subr.bf16.mxu0 0
        %1218 = vmatpush1.bf16.msra.mxu0 0
        %1219 = vmatprep.subr.bf16.mxu0 0
        %1220 = vmatpush1.bf16.msra.mxu0 0
        %1221 = vmatprep.subr.bf16.mxu0 0
        %1222 = vmatpush1.bf16.msra.mxu0 0
        %1223 = vmatprep.subr.bf16.mxu0 0
        %1224 = vmatpush1.bf16.msra.mxu0 0
        %1225 = vmatprep.mubr.bf16.mxu0 0
        %1226 = vmatmul.mubr.bf16.gmra.mrb[0].mxu0 %v1192
        %v1227 = vpop.f32.mrb[0].mxu0
        %v1228 = vadd.f32 %v694, %v1227
        %v1229 = vpop.f32.mrb[0].mxu0
        %v1230 = vadd.f32 %v698, %v1229
        %v1231 = vpop.f32.mrb[0].mxu0
        %v1232 = vpop.f32.mrb[0].mxu0
        %1233 = vdwg.mxu0
        %1234 = vmatprep.subr.bf16.mxu0 0
        %1235 = vmatpush1.bf16.msra.mxu0 %v800
        %1236 = vmatprep.subr.bf16.mxu0 0
        %1237 = vmatpush1.bf16.msra.mxu0 %v803
        %1238 = vmatprep.subr.bf16.mxu0 0
        %1239 = vmatpush1.bf16.msra.mxu0 %v806
        %1240 = vmatprep.subr.bf16.mxu0 0
        %1241 = vmatpush1.bf16.msra.mxu0 %v809
        %1242 = vmatprep.subr.bf16.mxu0 0
        %1243 = vmatpush1.bf16.msra.mxu0 %v812
        %1244 = vmatprep.subr.bf16.mxu0 0
        %1245 = vmatpush1.bf16.msra.mxu0 %v815
        %1246 = vmatprep.subr.bf16.mxu0 0
        %1247 = vmatpush1.bf16.msra.mxu0 %v818
        %1248 = vmatprep.subr.bf16.mxu0 0
        %1249 = vmatpush1.bf16.msra.mxu0 %v821
        %1250 = vmatprep.subr.bf16.mxu0 0
        %1251 = vmatpush1.bf16.msra.mxu0 0
        %1252 = vmatprep.subr.bf16.mxu0 0
        %1253 = vmatpush1.bf16.msra.mxu0 0
        %1254 = vmatprep.subr.bf16.mxu0 0
        %1255 = vmatpush1.bf16.msra.mxu0 0
        %1256 = vmatprep.subr.bf16.mxu0 0
        %1257 = vmatpush1.bf16.msra.mxu0 0
        %1258 = vmatprep.subr.bf16.mxu0 0
        %1259 = vmatpush1.bf16.msra.mxu0 0
        %1260 = vmatprep.subr.bf16.mxu0 0
        %1261 = vmatpush1.bf16.msra.mxu0 0
        %1262 = vmatprep.subr.bf16.mxu0 0
        %1263 = vmatpush1.bf16.msra.mxu0 0
        %1264 = vmatprep.subr.bf16.mxu0 0
        %1265 = vmatpush1.bf16.msra.mxu0 0
        %1266 = vmatprep.mubr.bf16.mxu0 0
        %1267 = vmatmul.mubr.bf16.gmra.mrb[0].mxu0 %v1192
        %v1268 = vpop.f32.mrb[0].mxu0
        %v1269 = vadd.f32 %v702, %v1268
        %v1270 = vpop.f32.mrb[0].mxu0
        %v1271 = vpop.f32.mrb[0].mxu0
        %v1272 = vpop.f32.mrb[0].mxu0
        %1273 = vdwg.mxu0
        %v1274 = vadd.f32 %v1189, %v1228
        %v1275 = vxor.u32 %v1274, 2147483648
        %v1276 = vmul.f32 %v1275, 1.442695
        %v1277 = vpow.pop %v1276
        %v1278 = vadd.f32 %v1277, 1.0
        %v1279 = vrcp.pop %v1278
        %v1280 = vmul.f32 1.0, %v1279
        %v1281 = vadd.f32 %v1190, %v1230
        %v1282 = vxor.u32 %v1281, 2147483648
        %v1283 = vmul.f32 %v1282, 1.442695
        %v1284 = vpow.pop %v1283
        %v1285 = vadd.f32 %v1284, 1.0
        %v1286 = vrcp.pop %v1285
        %v1287 = vmul.f32 1.0, %v1286
        %v1288 = vmul.f32 %v1280, %v1269
        %v1289 = vadd.f32 %v1191, %v1288
        %v1290 = vtanh.pop %v1289
        %v1291 = vsub.f32 1.0, %v1287
        %v1292 = vmul.f32 %v1291, %v1290
        %v1293 = vmul.f32 %v1287, %v1178
        %v1294 = vadd.f32 %v1292, %v1293
        %s1295 = scalar_lea.vmem %s414, %s1183 [#allocation7]
        %1296 = vst [vmem:[%s1295] sm:$0xff] %v1294
        %1297 = vst [vmem:[#allocation2] sm:$0xff] %v1294
        %p1298 = scmp.eq.s32.totalorder %s33, 1
        // Predicated region
        $region53: #{tpu_custom_call.1} parent=43 // pred_check
          %p1299 = pneg %p1298
        $region54: #{tpu_custom_call.1} parent=43 // pred_check_branch
          %1301 = sbr.rel (%p1299) target = $region56
        $region55: #{tpu_custom_call.1} parent=43 // pred_region
          %v1302 = vpack.c.bf16 %v1294, %v1294
          %v1303 = vld [vmem:[%s453] sm:$0xf]
          %v1304 = vld [vmem:[%s453 + $0x4] sm:$0xf]
          %v1305 = vld [vmem:[%s453 + $0x8] sm:$0xf]
          %v1306 = vld [vmem:[%s453 + $0xc] sm:$0xf]
          %v1307 = vld [vmem:[%s453 + $0x10] sm:$0xf]
          %v1308 = vld [vmem:[%s453 + $0x14] sm:$0xf]
          %v1309 = vld [vmem:[%s453 + $0x18] sm:$0xf]
          %v1310 = vld [vmem:[%s453 + $0x1c] sm:$0xf]
          %v1311 = vld [vmem:[%s453 + $0x20] sm:$0xf]
          %v1312 = vld [vmem:[%s453 + $0x24] sm:$0xf]
          %v1313 = vld [vmem:[%s453 + $0x28] sm:$0xf]
          %v1314 = vld [vmem:[%s453 + $0x2c] sm:$0xf]
          %v1315 = vld [vmem:[%s453 + $0x30] sm:$0xf]
          %v1316 = vld [vmem:[%s453 + $0x34] sm:$0xf]
          %v1317 = vld [vmem:[%s453 + $0x38] sm:$0xf]
          %v1318 = vld [vmem:[%s453 + $0x3c] sm:$0xf]
          %v1335 = vunpack.c.l.b16 %v1303
          %v1336 = vunpack.c.l.b16 %v1304
          %v1337 = vunpack.c.l.b16 %v1305
          %v1338 = vunpack.c.l.b16 %v1306
          %v1339 = vunpack.c.l.b16 %v1307
          %v1340 = vunpack.c.l.b16 %v1308
          %v1341 = vunpack.c.l.b16 %v1309
          %v1342 = vunpack.c.l.b16 %v1310
          %v1343 = vunpack.c.l.b16 %v1311
          %v1344 = vunpack.c.l.b16 %v1312
          %v1345 = vunpack.c.l.b16 %v1313
          %v1346 = vunpack.c.l.b16 %v1314
          %v1347 = vunpack.c.l.b16 %v1315
          %v1348 = vunpack.c.l.b16 %v1316
          %v1349 = vunpack.c.l.b16 %v1317
          %v1350 = vunpack.c.l.b16 %v1318
          %v1351 = vpack.c.b16 %v1336, %v1335
          %v1352 = vpack.c.b16 %v1338, %v1337
          %v1353 = vpack.c.b16 %v1340, %v1339
          %v1354 = vpack.c.b16 %v1342, %v1341
          %v1355 = vpack.c.b16 %v1344, %v1343
          %v1356 = vpack.c.b16 %v1346, %v1345
          %v1357 = vpack.c.b16 %v1348, %v1347
          %v1358 = vpack.c.b16 %v1350, %v1349
          %1367 = vmatprep.subr.bf16.mxu0 0
          %1368 = vmatpush1.bf16.msra.mxu0 %v1351
          %1369 = vmatprep.subr.bf16.mxu0 0
          %1370 = vmatpush1.bf16.msra.mxu0 %v1352
          %1371 = vmatprep.subr.bf16.mxu0 0
          %1372 = vmatpush1.bf16.msra.mxu0 %v1353
          %1373 = vmatprep.subr.bf16.mxu0 0
          %1374 = vmatpush1.bf16.msra.mxu0 %v1354
          %1375 = vmatprep.subr.bf16.mxu0 0
          %1376 = vmatpush1.bf16.msra.mxu0 %v1355
          %1377 = vmatprep.subr.bf16.mxu0 0
          %1378 = vmatpush1.bf16.msra.mxu0 %v1356
          %1379 = vmatprep.subr.bf16.mxu0 0
          %1380 = vmatpush1.bf16.msra.mxu0 %v1357
          %1381 = vmatprep.subr.bf16.mxu0 0
          %1382 = vmatpush1.bf16.msra.mxu0 %v1358
          %1383 = vmatprep.subr.bf16.mxu0 0
          %1384 = vmatpush1.bf16.msra.mxu0 0
          %1385 = vmatprep.subr.bf16.mxu0 0
          %1386 = vmatpush1.bf16.msra.mxu0 0
          %1387 = vmatprep.subr.bf16.mxu0 0
          %1388 = vmatpush1.bf16.msra.mxu0 0
          %1389 = vmatprep.subr.bf16.mxu0 0
          %1390 = vmatpush1.bf16.msra.mxu0 0
          %1391 = vmatprep.subr.bf16.mxu0 0
          %1392 = vmatpush1.bf16.msra.mxu0 0
          %1393 = vmatprep.subr.bf16.mxu0 0
          %1394 = vmatpush1.bf16.msra.mxu0 0
          %1395 = vmatprep.subr.bf16.mxu0 0
          %1396 = vmatpush1.bf16.msra.mxu0 0
          %1397 = vmatprep.subr.bf16.mxu0 0
          %1398 = vmatpush1.bf16.msra.mxu0 0
          %1399 = vmatprep.mubr.bf16.mxu0 0
          %1400 = vmatmul.mubr.bf16.gmra.mrb[0].mxu0 %v1302
          %v1401 = vpop.f32.mrb[0].mxu0
          %v1402 = vadd.f32 0.0, %v1401
          %v1403 = vpop.f32.mrb[0].mxu0
          %v1404 = vpop.f32.mrb[0].mxu0
          %v1405 = vpop.f32.mrb[0].mxu0
          %1406 = vdwg.mxu0
          %1407 = vst.msk [vmem:[%s421] sm:$0xff] %vm536, %v1402
        $region56: #{tpu_custom_call.1} parent=43 // pred_fallthru
          _
        %s1408 = sand.u32 %s222, 1
        %s1409 = scalar_lea.sflag [#allocation6], %s1408
        %s1410 = sand.u32 %s222, 1
        %s1411 = smul.addr %s1410, 32
        %s1412 = scalar_lea.vmem [#allocation7], %s1411
        %s1413 = sand.u32 %s248, 1
        %s1414 = scalar_lea.sflag [#allocation9], %s1413
        %s1415 = sand.u32 %s248, 1
        %s1416 = smul.addr %s1415, 8
        %s1417 = scalar_lea.vmem [#allocation8], %s1416
        // Predicated region
        $region57: #{tpu_custom_call.1} parent=43 // pred_check
          %p1418 = pneg %p232
        $region58: #{tpu_custom_call.1} parent=43 // pred_check_branch
          %1420 = sbr.rel (%p1418) target = $region60
        $region59: #{tpu_custom_call.1} parent=43 // pred_region
          %s1421 = smul.u32 %s33, 2
          %s1422 = ssub.s32 1, %s1421
          %s1423 = smul.u32 %s32, %s1422
          %s1424 = sadd.s32 %s33, %s1423
          %s1425 = smul.u32 4, %s1424
          %s1427 = ssub.s32 512, 512
          %1428 = vsyncadd %s1409, %s1427
          %s1429 = smul.addr %s1425, 2
          %s1430 = sadd.s32 %s32, %s1429
          %s1431 = smul.addr %s1430, 128
          %s1432 = scalar_lea.hbm %s6, %s1431
          %s1433 = sshll.u32 %s1412, 4
          %s1434 = int_to_ptr.vmem [resolvable:$true] %s1433
          %1439 = dma.vmem_to_hbm [thread:$0]  %s1434, 512, %s1432, %s1409, 128, 256, 8
        $region60: #{tpu_custom_call.1} parent=43 // pred_fallthru
          _
        // Predicated region
        $region61: #{tpu_custom_call.1} parent=43 // pred_check
          %p1440 = pneg %p258
        $region62: #{tpu_custom_call.1} parent=43 // pred_check_branch
          %1442 = sbr.rel (%p1440) target = $region64
        $region63: #{tpu_custom_call.1} parent=43 // pred_region
          %s1444 = ssub.s32 128, 128
          %1445 = vsyncadd %s1414, %s1444
          %s1446 = smul.addr %s32, 128
          %s1447 = scalar_lea.hbm %s7, %s1446
          %s1449 = sshll.u32 %s1417, 4
          %s1450 = int_to_ptr.vmem [resolvable:$true] %s1449
          %1452 = dma.vmem_to_hbm [thread:$0]  %s1450, 128, %s1447, %s1414
        $region64: #{tpu_custom_call.1} parent=43 // pred_fallthru
          _
      $region44: #{tpu_custom_call.1} parent=5 // pred_fallthru
        _
      %p1453 = scmp.le.s32.totalorder 2, %s23
      // Predicated region
      $region65: #{tpu_custom_call.1} parent=5 // pred_check
        %p1454 = pneg %p1453
      $region66: #{tpu_custom_call.1} parent=5 // pred_check_branch
        %1456 = sbr.rel (%p1454) target = $region68
      $region67: #{tpu_custom_call.1} parent=5 // pred_region
        %s1457 = ssub.s32 %s23, 2
        // Predicated region
        $region69: #{tpu_custom_call.1} parent=67 // pred_check
          %p1458 = pneg %p238
        $region70: #{tpu_custom_call.1} parent=67 // pred_check_branch
          %1460 = sbr.rel (%p1458) target = $region72
        $region71: #{tpu_custom_call.1} parent=67 // pred_region
          %s1461 = sand.u32 %s223, 1
          %s1462 = scalar_lea.sflag [#allocation6], %s1461
          %s1463 = sand.u32 %s223, 1
          %s1464 = smul.addr %s1463, 32
          %s1465 = scalar_lea.vmem [#allocation7], %s1464
          %1466 = dma.done %s1462, 512
        $region72: #{tpu_custom_call.1} parent=67 // pred_fallthru
          _
        // Predicated region
        $region73: #{tpu_custom_call.1} parent=67 // pred_check
          %p1467 = pneg %p264
        $region74: #{tpu_custom_call.1} parent=67 // pred_check_branch
          %1469 = sbr.rel (%p1467) target = $region76
        $region75: #{tpu_custom_call.1} parent=67 // pred_region
          %s1470 = sand.u32 %s249, 1
          %s1471 = scalar_lea.sflag [#allocation9], %s1470
          %s1472 = sand.u32 %s249, 1
          %s1473 = smul.addr %s1472, 8
          %s1474 = scalar_lea.vmem [#allocation8], %s1473
          %1475 = dma.done %s1471, 128
        $region76: #{tpu_custom_call.1} parent=67 // pred_fallthru
          _
      $region68: #{tpu_custom_call.1} parent=5 // pred_fallthru
        _
    $region6: #{tpu_custom_call.1} parent=1 // loop_footer
      %s27 = sadd.s32 1, %s23
    $region7: #{tpu_custom_call.1} parent=1 // loop_footer_branch
      %22 = sbr.rel target = $region3
    $region8: #{tpu_custom_call.1} parent=1 // loop_exit
      _
    %1476 = vsyncpa [#allocation5], 1
    %s1477 = scalar_lea.sflag [#allocation5], 1
    %1478 = vsyncpa %s1477, 1
    %1479 = vsyncpa [#allocation6], 1
    %s1480 = scalar_lea.sflag [#allocation6], 1
    %1481 = vsyncpa %s1480, 1
    %1482 = vsyncpa [#allocation9], 1
    %s1483 = scalar_lea.sflag [#allocation9], 1
    %1484 = vsyncpa %s1483, 1

</llo_original>
